<compile_context>
chip_gen: v7x
topology: tpu7x:2x2x1
jax: 0.10.0
libtpu: 0.0.40
codegen_flags: <defaults>
</compile_context>

<pallas_src>
import random

import jax
import jax.numpy as jnp
from jax import lax
from jax.experimental import pallas as pl
from jax.experimental.pallas import tpu as pltpu


def _round_up(x, m):
    return (x + m - 1) // m * m


# ----------------------------- fused encoder --------------------------------

def _encoder_kernel(x_ref, w_ref, b_ref, h_ref, c_ref):
    """Grid over src_len.  h_ref / c_ref are VMEM-resident outputs (constant
    block index) that double as the recurrent state."""
    t = pl.program_id(0)

    @pl.when(t == 0)
    def _():
        h_ref[...] = jnp.zeros_like(h_ref)
        c_ref[...] = jnp.zeros_like(c_ref)

    x = x_ref[0]                       # (B, E) embedded source token at step t
    h = h_ref[...]
    c = c_ref[...]
    hidden = h.shape[-1]

    xh = jnp.concatenate([x, h], axis=-1)                       # (B, E+H)
    gates = jnp.dot(xh, w_ref[...],
                    preferred_element_type=jnp.float32) + b_ref[...]
    i_g = jax.nn.sigmoid(gates[:, 0 * hidden:1 * hidden])
    f_g = jax.nn.sigmoid(gates[:, 1 * hidden:2 * hidden])
    g_g = jnp.tanh(gates[:, 2 * hidden:3 * hidden])
    o_g = jax.nn.sigmoid(gates[:, 3 * hidden:4 * hidden])

    c_new = f_g * c + i_g * g_g
    h_ref[...] = o_g * jnp.tanh(c_new)
    c_ref[...] = c_new


def _encoder_call(x_emb_seq, w, b):
    src_len, bp, emb = x_emb_seq.shape
    hidden = w.shape[1] // 4
    return pl.pallas_call(
        _encoder_kernel,
        out_shape=(jax.ShapeDtypeStruct((bp, hidden), jnp.float32),
                   jax.ShapeDtypeStruct((bp, hidden), jnp.float32)),
        grid_spec=pltpu.PrefetchScalarGridSpec(
            num_scalar_prefetch=0,
            grid=(src_len,),
            in_specs=[
                pl.BlockSpec((1, bp, emb), lambda t: (t, 0, 0)),
                pl.BlockSpec(w.shape, lambda t: (0, 0)),   # weights resident
                pl.BlockSpec(b.shape, lambda t: (0, 0)),
            ],
            out_specs=(pl.BlockSpec((bp, hidden), lambda t: (0, 0)),
                       pl.BlockSpec((bp, hidden), lambda t: (0, 0))),
        ),
        compiler_params=pltpu.CompilerParams(
            dimension_semantics=("arbitrary",)),
    )(x_emb_seq, w, b)


# ----------------------------- fused decoder --------------------------------

def _decoder_kernel(tf_ref,                       # SMEM scalar prefetch
                    x_teach_ref, h0_ref, c0_ref, emb_ref,
                    w_ref, b_ref, fcw_ref, fcb_ref,
                    out_ref,
                    h_sc, c_sc, prev_sc):
    """Grid over decode steps s = 0..trg_len-2 (output time index t = s+1)."""
    s = pl.program_id(0)
    bsz, hidden = h_sc.shape
    trg_vocab = emb_ref.shape[0]

    @pl.when(s == 0)
    def _():
        h_sc[...] = h0_ref[...]
        c_sc[...] = c0_ref[...]
        prev_sc[...] = jnp.zeros_like(prev_sc)

    # Input token embedding: teacher-forced rows are precomputed; the
    # model-fed path embeds the previous argmax via a one-hot MXU gather of
    # the VMEM-resident decoder embedding table.
    onehot = (prev_sc[...] ==
              lax.broadcasted_iota(jnp.int32, (bsz, trg_vocab), 1)
              ).astype(jnp.float32)                               # (B, TV)
    x_model = jnp.dot(onehot, emb_ref[...],
                      preferred_element_type=jnp.float32)         # (B, E)
    use_teacher = tf_ref[s] > 0
    x = jnp.where(use_teacher, x_teach_ref[0], x_model)

    # Single fused LSTM matmul: [x, h] @ [Wih; Whh] + b
    xh = jnp.concatenate([x, h_sc[...]], axis=-1)
    gates = jnp.dot(xh, w_ref[...],
                    preferred_element_type=jnp.float32) + b_ref[...]
    i_g = jax.nn.sigmoid(gates[:, 0 * hidden:1 * hidden])
    f_g = jax.nn.sigmoid(gates[:, 1 * hidden:2 * hidden])
    g_g = jnp.tanh(gates[:, 2 * hidden:3 * hidden])
    o_g = jax.nn.sigmoid(gates[:, 3 * hidden:4 * hidden])
    c_new = f_g * c_sc[...] + i_g * g_g
    h_new = o_g * jnp.tanh(c_new)
    h_sc[...] = h_new
    c_sc[...] = c_new

    # Output projection (vocab padded to a 128-lane multiple; pad bias=-1e30).
    logits = jnp.dot(h_new, fcw_ref[...],
                     preferred_element_type=jnp.float32) + fcb_ref[...]
    out_ref[0] = logits

    # In-kernel argmax (first max index, matching torch argmax tie-breaking).
    vpad = logits.shape[-1]
    col_ids = lax.broadcasted_iota(jnp.int32, logits.shape, 1)
    row_max = jnp.max(logits, axis=-1, keepdims=True)
    cand = jnp.where(logits == row_max, col_ids, vpad)
    prev_sc[...] = jnp.min(cand, axis=-1, keepdims=True)


def _decoder_call(tf_mask, x_teach, h0, c0, dec_emb, w, b, fc_w, fc_b):
    steps, bp, emb = x_teach.shape
    hidden = h0.shape[1]
    trg_vocab = dec_emb.shape[0]
    vpad = fc_w.shape[1]
    return pl.pallas_call(
        _decoder_kernel,
        out_shape=jax.ShapeDtypeStruct((steps, bp, vpad), jnp.float32),
        grid_spec=pltpu.PrefetchScalarGridSpec(
            num_scalar_prefetch=1,                     # tf_mask -> SMEM
            grid=(steps,),
            in_specs=[
                pl.BlockSpec((1, bp, emb), lambda s, tf: (s, 0, 0)),
                pl.BlockSpec((bp, hidden), lambda s, tf: (0, 0)),
                pl.BlockSpec((bp, hidden), lambda s, tf: (0, 0)),
                pl.BlockSpec((trg_vocab, emb), lambda s, tf: (0, 0)),
                pl.BlockSpec(w.shape, lambda s, tf: (0, 0)),
                pl.BlockSpec(b.shape, lambda s, tf: (0, 0)),
                pl.BlockSpec(fc_w.shape, lambda s, tf: (0, 0)),
                pl.BlockSpec(fc_b.shape, lambda s, tf: (0, 0)),
            ],
            out_specs=pl.BlockSpec((1, bp, vpad), lambda s, tf: (s, 0, 0)),
            scratch_shapes=[
                pltpu.VMEM((bp, hidden), jnp.float32),   # h
                pltpu.VMEM((bp, hidden), jnp.float32),   # c
                pltpu.VMEM((bp, 1), jnp.int32),          # previous argmax
            ],
        ),
        compiler_params=pltpu.CompilerParams(
            dimension_semantics=("arbitrary",)),
    )(tf_mask, x_teach, h0, c0, dec_emb, w, b, fc_w, fc_b)


# ------------------------------- model glue ---------------------------------

def init_params(key, src_vocab, trg_vocab, emb_dim, hidden_dim):
    ks = jax.random.split(key, 12)
    scale = 0.1

    def rnd(k, shape):
        return scale * jax.random.normal(k, shape, jnp.float32)

    return {
        "enc_emb": rnd(ks[0], (src_vocab, emb_dim)),
        "enc_wih": rnd(ks[1], (emb_dim, 4 * hidden_dim)),
        "enc_whh": rnd(ks[2], (hidden_dim, 4 * hidden_dim)),
        "enc_bih": rnd(ks[3], (4 * hidden_dim,)),
        "enc_bhh": rnd(ks[4], (4 * hidden_dim,)),
        "dec_emb": rnd(ks[5], (trg_vocab, emb_dim)),
        "dec_wih": rnd(ks[6], (emb_dim, 4 * hidden_dim)),
        "dec_whh": rnd(ks[7], (hidden_dim, 4 * hidden_dim)),
        "dec_bih": rnd(ks[8], (4 * hidden_dim,)),
        "dec_bhh": rnd(ks[9], (4 * hidden_dim,)),
        "fc_w": rnd(ks[10], (hidden_dim, trg_vocab)),
        "fc_b": rnd(ks[11], (trg_vocab,)),
    }


@jax.jit
def _seq2seq_device(params, source, target, tf_mask):
    src_len, batch = source.shape
    trg_len = target.shape[0]
    hidden = params["enc_whh"].shape[0]
    trg_vocab = params["fc_w"].shape[1]

    # Pad batch to a sublane multiple (>=8); pad tokens are id 0 and sliced off.
    bp = _round_up(max(batch, 8), 8)
    src = jnp.pad(source, ((0, 0), (0, bp - batch)))
    trg = jnp.pad(target, ((0, 0), (0, bp - batch)))

    # Stack [Wih; Whh] and fold (b_ih + b_hh) like PyTorch's nn.LSTM sum.
    enc_w = jnp.concatenate([params["enc_wih"], params["enc_whh"]], axis=0)
    enc_b = (params["enc_bih"] + params["enc_bhh"]).reshape(1, -1)
    dec_w = jnp.concatenate([params["dec_wih"], params["dec_whh"]], axis=0)
    dec_b = (params["dec_bih"] + params["dec_bhh"]).reshape(1, -1)

    # Lane-dense, padded vocab projection; padded logits get -1e30 bias so the
    # in-kernel argmax never selects them.
    vpad = _round_up(trg_vocab, 128)
    fc_w = jnp.zeros((hidden, vpad), jnp.float32).at[:, :trg_vocab].set(
        params["fc_w"])
    fc_b = jnp.full((1, vpad), -1e30, jnp.float32).at[0, :trg_vocab].set(
        params["fc_b"])

    # Whole-sequence embedding gathers (single XLA gather each).
    src_emb = params["enc_emb"][src]              # (src_len, bp, emb)
    teach_emb = params["dec_emb"][trg[:-1]]       # (trg_len-1, bp, emb)

    h, c = _encoder_call(src_emb, enc_w, enc_b)
    logits = _decoder_call(tf_mask, teach_emb, h, c, params["dec_emb"],
                           dec_w, dec_b, fc_w, fc_b)
    logits = logits[:, :batch, :trg_vocab]

    # Match Seq2Seq.forward: outputs[0] stays zero.
    return jnp.concatenate(
        [jnp.zeros((1, batch, trg_vocab), jnp.float32), logits], axis=0)


def seq2seq_forward(params, source, target, teacher_force_ratio=0.5):
    """Mirrors Seq2Seq.forward; host random draws become a device-side mask."""
    trg_len = target.shape[0]
    tf = [1]                                   # step 0 always consumes target[0]
    for _ in range(1, trg_len - 1):
        tf.append(1 if random.random() < teacher_force_ratio else 0)
    tf_mask = jnp.asarray(tf, jnp.int32)
    return _seq2seq_device(params, source, target, tf_mask)


# ----------------------------- pure-JAX reference ---------------------------

def _reference_forward(params, source, target, tf_mask):
    src_len, batch = source.shape
    trg_len = target.shape[0]
    hidden = params["enc_whh"].shape[0]
    trg_vocab = params["fc_w"].shape[1]

    def cell(x, h, c, wih, whh, b):
        gates = x @ wih + h @ whh + b
        i = jax.nn.sigmoid(gates[:, :hidden])
        f = jax.nn.sigmoid(gates[:, hidden:2 * hidden])
        g = jnp.tanh(gates[:, 2 * hidden:3 * hidden])
        o = jax.nn.sigmoid(gates[:, 3 * hidden:])
        c = f * c + i * g
        return o * jnp.tanh(c), c

    enc_b = params["enc_bih"] + params["enc_bhh"]
    dec_b = params["dec_bih"] + params["dec_bhh"]
    h = jnp.zeros((batch, hidden), jnp.float32)
    c = jnp.zeros((batch, hidden), jnp.float32)
    for t in range(src_len):
        h, c = cell(params["enc_emb"][source[t]], h, c,
                    params["enc_wih"], params["enc_whh"], enc_b)

    outputs = [jnp.zeros((batch, trg_vocab), jnp.float32)]
    x_tok = target[0]
    prev_best = target[0]
    for s in range(trg_len - 1):
        if s > 0:
            x_tok = jnp.where(tf_mask[s] > 0, target[s], prev_best)
        h, c = cell(params["dec_emb"][x_tok], h, c,
                    params["dec_wih"], params["dec_whh"], dec_b)
        logits = h @ params["fc_w"] + params["fc_b"]
        outputs.append(logits)
        prev_best = jnp.argmax(logits, axis=1).astype(target.dtype)
    return jnp.stack(outputs, axis=0)


# ----------------------------------- main ------------------------------------

if __name__ == "__main__":
    random.seed(0)
    key = jax.random.PRNGKey(0)

    SRC_VOCAB, TRG_VOCAB = 32, 48
    EMB_DIM, HIDDEN_DIM = 128, 128        # lane-aligned gate/concat boundaries
    BATCH, SRC_LEN, TRG_LEN = 4, 6, 8

    k_params, k_src, k_trg = jax.random.split(key, 3)
    params = init_params(k_params, SRC_VOCAB, TRG_VOCAB, EMB_DIM, HIDDEN_DIM)
    source = jax.random.randint(k_src, (SRC_LEN, BATCH), 0, SRC_VOCAB, jnp.int32)
    target = jax.random.randint(k_trg, (TRG_LEN, BATCH), 0, TRG_VOCAB, jnp.int32)

    # Correctness check vs pure-JAX reference under full teacher forcing
    # (deterministic path, no argmax-tie divergence possible).
    tf_all = jnp.ones((TRG_LEN - 1,), jnp.int32)
    got = jax.block_until_ready(_seq2seq_device(params, source, target, tf_all))
    want = jax.block_until_ready(_reference_forward(params, source, target, tf_all))
    assert got.shape == (TRG_LEN, BATCH, TRG_VOCAB)
    max_err = float(jnp.max(jnp.abs(got - want)))
    assert max_err < 3e-2, f"mismatch vs reference: {max_err}"

    # Actual Seq2Seq.forward semantics with host-drawn teacher-forcing mask.
    outputs = seq2seq_forward(params, source, target, teacher_force_ratio=0.5)
    outputs = jax.block_until_ready(outputs)
    assert outputs.shape == (TRG_LEN, BATCH, TRG_VOCAB)
    assert outputs.dtype == jnp.float32
    assert bool(jnp.all(jnp.isfinite(outputs)))

    print("KERNEL_OK")
</pallas_src>

<mosaic_0001>
module attributes {stable_mosaic.version = 11 : i64} {
  func.func @_encoder_kernel(%arg0: i32, %arg1: memref<1x8x128xf32, #tpu.memory_space<vmem>>, %arg2: memref<256x512xf32, #tpu.memory_space<vmem>>, %arg3: memref<1x512xf32, #tpu.memory_space<vmem>>, %arg4: memref<8x128xf32, #tpu.memory_space<vmem>>, %arg5: memref<8x128xf32, #tpu.memory_space<vmem>>) attributes {dimension_semantics = [#tpu.dimension_semantics<arbitrary>], iteration_bounds = array<i64: 6>, scalar_prefetch = 0 : i64, scratch_operands = 0 : i64, tpu.core_type = #tpu.core_type<tc>, window_params = [{transform_indices = @transform_0, window_bounds = array<i64: 1, 8, 128>}, {pipeline_mode = #tpu.pipeline_mode<synchronous>, transform_indices = @transform_1, window_bounds = array<i64: 256, 512>}, {pipeline_mode = #tpu.pipeline_mode<synchronous>, transform_indices = @transform_2, window_bounds = array<i64: 1, 512>}, {pipeline_mode = #tpu.pipeline_mode<synchronous>, transform_indices = @transform_3, window_bounds = array<i64: 8, 128>}, {pipeline_mode = #tpu.pipeline_mode<synchronous>, transform_indices = @transform_4, window_bounds = array<i64: 8, 128>}]} {
    %c0_i32 = arith.constant 0 : i32
    %0 = arith.cmpi eq, %arg0, %c0_i32 : i32
    %1 = arith.extui %0 : i1 to i32
    %c0_i32_0 = arith.constant 0 : i32
    %2 = arith.cmpi ne, %1, %c0_i32_0 : i32
    scf.if %2 {
      %cst_18 = arith.constant 0.000000e+00 : f32
      %40 = vector.broadcast %cst_18 : f32 to vector<8x128xf32>
      %c0_19 = arith.constant 0 : index
      %c0_20 = arith.constant 0 : index
      %41 = vector.load %arg4[%c0_19, %c0_20] : memref<8x128xf32, #tpu.memory_space<vmem>>, vector<8x128xf32>
      tpu.vector_store %arg4[%c0_19, %c0_20], %40 {strides = array<i32>} : memref<8x128xf32, #tpu.memory_space<vmem>>, vector<8x128xf32>,
      %cst_21 = arith.constant 0.000000e+00 : f32
      %42 = vector.broadcast %cst_21 : f32 to vector<8x128xf32>
      %c0_22 = arith.constant 0 : index
      %c0_23 = arith.constant 0 : index
      %43 = vector.load %arg5[%c0_22, %c0_23] : memref<8x128xf32, #tpu.memory_space<vmem>>, vector<8x128xf32>
      tpu.vector_store %arg5[%c0_22, %c0_23], %42 {strides = array<i32>} : memref<8x128xf32, #tpu.memory_space<vmem>>, vector<8x128xf32>,
    } else {
    }
    %c0 = arith.constant 0 : index
    %c0_1 = arith.constant 0 : index
    %c0_2 = arith.constant 0 : index
    %3 = vector.load %arg1[%c0, %c0_1, %c0_2] : memref<1x8x128xf32, #tpu.memory_space<vmem>>, vector<1x8x128xf32>
    %4 = vector.shape_cast %3 : vector<1x8x128xf32> to vector<8x128xf32>
    %c0_3 = arith.constant 0 : index
    %c0_4 = arith.constant 0 : index
    %5 = vector.load %arg4[%c0_3, %c0_4] : memref<8x128xf32, #tpu.memory_space<vmem>>, vector<8x128xf32>
    %c0_5 = arith.constant 0 : index
    %c0_6 = arith.constant 0 : index
    %6 = vector.load %arg5[%c0_5, %c0_6] : memref<8x128xf32, #tpu.memory_space<vmem>>, vector<8x128xf32>
    %7 = tpu.concatenate %4, %5 in 1 : vector<8x128xf32>, vector<8x128xf32> -> vector<8x256xf32>
    %c0_7 = arith.constant 0 : index
    %c0_8 = arith.constant 0 : index
    %8 = vector.load %arg2[%c0_7, %c0_8] : memref<256x512xf32, #tpu.memory_space<vmem>>, vector<256x512xf32>
    %cst = arith.constant dense<0.000000e+00> : vector<8x512xf32>
    %9 = tpu.matmul %7, %8, %cst {dimension_numbers = #tpu.dot_dimension_numbers<[1], [0], [0], [1], [0, 0, 1, 1], [], []>} : vector<8x256xf32>, vector<256x512xf32>, vector<8x512xf32> -> vector<8x512xf32>
    %c0_9 = arith.constant 0 : index
    %c0_10 = arith.constant 0 : index
    %10 = vector.load %arg3[%c0_9, %c0_10] : memref<1x512xf32, #tpu.memory_space<vmem>>, vector<1x512xf32>
    %11 = vector.broadcast %10 : vector<1x512xf32> to vector<8x512xf32>
    %12 = arith.addf %9, %11 : vector<8x512xf32>
    %13 = vector.extract_strided_slice %12 {offsets = [0, 0], sizes = [8, 128], strides = [1, 1]} : vector<8x512xf32> to vector<8x128xf32>
    %14 = arith.negf %13 : vector<8x128xf32>
    %15 = math.exp %14 : vector<8x128xf32>
    %cst_11 = arith.constant 1.000000e+00 : f32
    %16 = vector.broadcast %cst_11 : f32 to vector<8x128xf32>
    %17 = arith.addf %16, %15 : vector<8x128xf32>
    %18 = arith.divf %16, %17 : vector<8x128xf32>
    %19 = vector.extract_strided_slice %12 {offsets = [0, 128], sizes = [8, 128], strides = [1, 1]} : vector<8x512xf32> to vector<8x128xf32>
    %20 = arith.negf %19 : vector<8x128xf32>
    %21 = math.exp %20 : vector<8x128xf32>
    %cst_12 = arith.constant 1.000000e+00 : f32
    %22 = vector.broadcast %cst_12 : f32 to vector<8x128xf32>
    %23 = arith.addf %22, %21 : vector<8x128xf32>
    %24 = arith.divf %22, %23 : vector<8x128xf32>
    %25 = vector.extract_strided_slice %12 {offsets = [0, 256], sizes = [8, 128], strides = [1, 1]} : vector<8x512xf32> to vector<8x128xf32>
    %26 = math.tanh %25 : vector<8x128xf32>
    %27 = vector.extract_strided_slice %12 {offsets = [0, 384], sizes = [8, 128], strides = [1, 1]} : vector<8x512xf32> to vector<8x128xf32>
    %28 = arith.negf %27 : vector<8x128xf32>
    %29 = math.exp %28 : vector<8x128xf32>
    %cst_13 = arith.constant 1.000000e+00 : f32
    %30 = vector.broadcast %cst_13 : f32 to vector<8x128xf32>
    %31 = arith.addf %30, %29 : vector<8x128xf32>
    %32 = arith.divf %30, %31 : vector<8x128xf32>
    %33 = arith.mulf %24, %6 : vector<8x128xf32>
    %34 = arith.mulf %18, %26 : vector<8x128xf32>
    %35 = arith.addf %33, %34 : vector<8x128xf32>
    %36 = math.tanh %35 : vector<8x128xf32>
    %37 = arith.mulf %32, %36 : vector<8x128xf32>
    %c0_14 = arith.constant 0 : index
    %c0_15 = arith.constant 0 : index
    %38 = vector.load %arg4[%c0_14, %c0_15] : memref<8x128xf32, #tpu.memory_space<vmem>>, vector<8x128xf32>
    tpu.vector_store %arg4[%c0_14, %c0_15], %37 {strides = array<i32>} : memref<8x128xf32, #tpu.memory_space<vmem>>, vector<8x128xf32>,
    %c0_16 = arith.constant 0 : index
    %c0_17 = arith.constant 0 : index
    %39 = vector.load %arg5[%c0_16, %c0_17] : memref<8x128xf32, #tpu.memory_space<vmem>>, vector<8x128xf32>
    tpu.vector_store %arg5[%c0_16, %c0_17], %35 {strides = array<i32>} : memref<8x128xf32, #tpu.memory_space<vmem>>, vector<8x128xf32>,
    return
  }
  func.func @transform_0(%arg0: i32) -> (i32, i32, i32) {
    %c0_i32 = arith.constant 0 : i32
    %c0_i32_0 = arith.constant 0 : i32
    %c0_i32_1 = arith.constant 0 : i32
    return %arg0, %c0_i32, %c0_i32_0 : i32, i32, i32
  }
  func.func @transform_1(%arg0: i32) -> (i32, i32) {
    %c0_i32 = arith.constant 0 : i32
    %c0_i32_0 = arith.constant 0 : i32
    %c0_i32_1 = arith.constant 0 : i32
    return %c0_i32, %c0_i32_0 : i32, i32
  }
  func.func @transform_2(%arg0: i32) -> (i32, i32) {
    %c0_i32 = arith.constant 0 : i32
    %c0_i32_0 = arith.constant 0 : i32
    %c0_i32_1 = arith.constant 0 : i32
    return %c0_i32, %c0_i32_0 : i32, i32
  }
  func.func @transform_3(%arg0: i32) -> (i32, i32) {
    %c0_i32 = arith.constant 0 : i32
    %c0_i32_0 = arith.constant 0 : i32
    %c0_i32_1 = arith.constant 0 : i32
    return %c0_i32, %c0_i32_0 : i32, i32
  }
  func.func @transform_4(%arg0: i32) -> (i32, i32) {
    %c0_i32 = arith.constant 0 : i32
    %c0_i32_0 = arith.constant 0 : i32
    %c0_i32_1 = arith.constant 0 : i32
    return %c0_i32, %c0_i32_0 : i32, i32
  }
}

module attributes {stable_mosaic.version = 11 : i64} {
  func.func @_decoder_kernel(%arg0: i32, %arg1: memref<7xi32, #tpu.memory_space<smem>>, %arg2: memref<1x8x128xf32, #tpu.memory_space<vmem>>, %arg3: memref<8x128xf32, #tpu.memory_space<vmem>>, %arg4: memref<8x128xf32, #tpu.memory_space<vmem>>, %arg5: memref<48x128xf32, #tpu.memory_space<vmem>>, %arg6: memref<256x512xf32, #tpu.memory_space<vmem>>, %arg7: memref<1x512xf32, #tpu.memory_space<vmem>>, %arg8: memref<128x128xf32, #tpu.memory_space<vmem>>, %arg9: memref<1x128xf32, #tpu.memory_space<vmem>>, %arg10: memref<1x8x128xf32, #tpu.memory_space<vmem>>, %arg11: memref<8x128xf32, #tpu.memory_space<vmem>>, %arg12: memref<8x128xf32, #tpu.memory_space<vmem>>, %arg13: memref<8x1xi32, #tpu.memory_space<vmem>>) attributes {dimension_semantics = [#tpu.dimension_semantics<arbitrary>], iteration_bounds = array<i64: 7>, scalar_prefetch = 1 : i64, scratch_operands = 3 : i64, tpu.core_type = #tpu.core_type<tc>, window_params = [{transform_indices = @transform_0, window_bounds = array<i64: 1, 8, 128>}, {pipeline_mode = #tpu.pipeline_mode<synchronous>, transform_indices = @transform_1, window_bounds = array<i64: 8, 128>}, {pipeline_mode = #tpu.pipeline_mode<synchronous>, transform_indices = @transform_2, window_bounds = array<i64: 8, 128>}, {pipeline_mode = #tpu.pipeline_mode<synchronous>, transform_indices = @transform_3, window_bounds = array<i64: 48, 128>}, {pipeline_mode = #tpu.pipeline_mode<synchronous>, transform_indices = @transform_4, window_bounds = array<i64: 256, 512>}, {pipeline_mode = #tpu.pipeline_mode<synchronous>, transform_indices = @transform_5, window_bounds = array<i64: 1, 512>}, {pipeline_mode = #tpu.pipeline_mode<synchronous>, transform_indices = @transform_6, window_bounds = array<i64: 128, 128>}, {pipeline_mode = #tpu.pipeline_mode<synchronous>, transform_indices = @transform_7, window_bounds = array<i64: 1, 128>}, {transform_indices = @transform_8, window_bounds = array<i64: 1, 8, 128>}]} {
    %c0_i32 = arith.constant 0 : i32
    %0 = arith.cmpi eq, %arg0, %c0_i32 : i32
    %1 = arith.extui %0 : i1 to i32
    %c0_i32_0 = arith.constant 0 : i32
    %2 = arith.cmpi ne, %1, %c0_i32_0 : i32
    scf.if %2 {
      %c0_36 = arith.constant 0 : index
      %c0_37 = arith.constant 0 : index
      %70 = vector.load %arg3[%c0_36, %c0_37] : memref<8x128xf32, #tpu.memory_space<vmem>>, vector<8x128xf32>
      %c0_38 = arith.constant 0 : index
      %c0_39 = arith.constant 0 : index
      %71 = vector.load %arg11[%c0_38, %c0_39] : memref<8x128xf32, #tpu.memory_space<vmem>>, vector<8x128xf32>
      tpu.vector_store %arg11[%c0_38, %c0_39], %70 {strides = array<i32>} : memref<8x128xf32, #tpu.memory_space<vmem>>, vector<8x128xf32>,
      %c0_40 = arith.constant 0 : index
      %c0_41 = arith.constant 0 : index
      %72 = vector.load %arg4[%c0_40, %c0_41] : memref<8x128xf32, #tpu.memory_space<vmem>>, vector<8x128xf32>
      %c0_42 = arith.constant 0 : index
      %c0_43 = arith.constant 0 : index
      %73 = vector.load %arg12[%c0_42, %c0_43] : memref<8x128xf32, #tpu.memory_space<vmem>>, vector<8x128xf32>
      tpu.vector_store %arg12[%c0_42, %c0_43], %72 {strides = array<i32>} : memref<8x128xf32, #tpu.memory_space<vmem>>, vector<8x128xf32>,
      %c0_i32_44 = arith.constant 0 : i32
      %74 = vector.broadcast %c0_i32_44 : i32 to vector<8x1xi32>
      %c0_45 = arith.constant 0 : index
      %c0_46 = arith.constant 0 : index
      %75 = vector.load %arg13[%c0_45, %c0_46] : memref<8x1xi32, #tpu.memory_space<vmem>>, vector<8x1xi32>
      tpu.vector_store %arg13[%c0_45, %c0_46], %74 {strides = array<i32>} : memref<8x1xi32, #tpu.memory_space<vmem>>, vector<8x1xi32>,
    } else {
    }
    %c0 = arith.constant 0 : index
    %c0_1 = arith.constant 0 : index
    %3 = vector.load %arg13[%c0, %c0_1] : memref<8x1xi32, #tpu.memory_space<vmem>>, vector<8x1xi32>
    %4 = tpu.iota {dimensions = array<i32: 1>} : vector<8x48xi32>
    %5 = vector.broadcast %3 : vector<8x1xi32> to vector<8x48xi32>
    %6 = arith.cmpi eq, %5, %4 : vector<8x48xi32>
    %7 = arith.extui %6 : vector<8x48xi1> to vector<8x48xi32>
    %8 = arith.sitofp %7 : vector<8x48xi32> to vector<8x48xf32>
    %c0_2 = arith.constant 0 : index
    %c0_3 = arith.constant 0 : index
    %9 = vector.load %arg5[%c0_2, %c0_3] : memref<48x128xf32, #tpu.memory_space<vmem>>, vector<48x128xf32>
    %cst = arith.constant dense<0.000000e+00> : vector<8x128xf32>
    %10 = tpu.matmul %8, %9, %cst {dimension_numbers = #tpu.dot_dimension_numbers<[1], [0], [0], [1], [0, 0, 1, 1], [], []>} : vector<8x48xf32>, vector<48x128xf32>, vector<8x128xf32> -> vector<8x128xf32>
    %11 = arith.index_cast %arg0 : i32 to index
    %12 = memref.load %arg1[%11] : memref<7xi32, #tpu.memory_space<smem>>
    %c0_i32_4 = arith.constant 0 : i32
    %13 = arith.cmpi sgt, %12, %c0_i32_4 : i32
    %c0_5 = arith.constant 0 : index
    %c0_6 = arith.constant 0 : index
    %c0_7 = arith.constant 0 : index
    %14 = vector.load %arg2[%c0_5, %c0_6, %c0_7] : memref<1x8x128xf32, #tpu.memory_space<vmem>>, vector<1x8x128xf32>
    %15 = vector.shape_cast %14 : vector<1x8x128xf32> to vector<8x128xf32>
    %16 = arith.select %13, %15, %10 : vector<8x128xf32>
    %c0_8 = arith.constant 0 : index
    %c0_9 = arith.constant 0 : index
    %17 = vector.load %arg11[%c0_8, %c0_9] : memref<8x128xf32, #tpu.memory_space<vmem>>, vector<8x128xf32>
    %18 = tpu.concatenate %16, %17 in 1 : vector<8x128xf32>, vector<8x128xf32> -> vector<8x256xf32>
    %c0_10 = arith.constant 0 : index
    %c0_11 = arith.constant 0 : index
    %19 = vector.load %arg6[%c0_10, %c0_11] : memref<256x512xf32, #tpu.memory_space<vmem>>, vector<256x512xf32>
    %cst_12 = arith.constant dense<0.000000e+00> : vector<8x512xf32>
    %20 = tpu.matmul %18, %19, %cst_12 {dimension_numbers = #tpu.dot_dimension_numbers<[1], [0], [0], [1], [0, 0, 1, 1], [], []>} : vector<8x256xf32>, vector<256x512xf32>, vector<8x512xf32> -> vector<8x512xf32>
    %c0_13 = arith.constant 0 : index
    %c0_14 = arith.constant 0 : index
    %21 = vector.load %arg7[%c0_13, %c0_14] : memref<1x512xf32, #tpu.memory_space<vmem>>, vector<1x512xf32>
    %22 = vector.broadcast %21 : vector<1x512xf32> to vector<8x512xf32>
    %23 = arith.addf %20, %22 : vector<8x512xf32>
    %24 = vector.extract_strided_slice %23 {offsets = [0, 0], sizes = [8, 128], strides = [1, 1]} : vector<8x512xf32> to vector<8x128xf32>
    %25 = arith.negf %24 : vector<8x128xf32>
    %26 = math.exp %25 : vector<8x128xf32>
    %cst_15 = arith.constant 1.000000e+00 : f32
    %27 = vector.broadcast %cst_15 : f32 to vector<8x128xf32>
    %28 = arith.addf %27, %26 : vector<8x128xf32>
    %29 = arith.divf %27, %28 : vector<8x128xf32>
    %30 = vector.extract_strided_slice %23 {offsets = [0, 128], sizes = [8, 128], strides = [1, 1]} : vector<8x512xf32> to vector<8x128xf32>
    %31 = arith.negf %30 : vector<8x128xf32>
    %32 = math.exp %31 : vector<8x128xf32>
    %cst_16 = arith.constant 1.000000e+00 : f32
    %33 = vector.broadcast %cst_16 : f32 to vector<8x128xf32>
    %34 = arith.addf %33, %32 : vector<8x128xf32>
    %35 = arith.divf %33, %34 : vector<8x128xf32>
    %36 = vector.extract_strided_slice %23 {offsets = [0, 256], sizes = [8, 128], strides = [1, 1]} : vector<8x512xf32> to vector<8x128xf32>
    %37 = math.tanh %36 : vector<8x128xf32>
    %38 = vector.extract_strided_slice %23 {offsets = [0, 384], sizes = [8, 128], strides = [1, 1]} : vector<8x512xf32> to vector<8x128xf32>
    %39 = arith.negf %38 : vector<8x128xf32>
    %40 = math.exp %39 : vector<8x128xf32>
    %cst_17 = arith.constant 1.000000e+00 : f32
    %41 = vector.broadcast %cst_17 : f32 to vector<8x128xf32>
    %42 = arith.addf %41, %40 : vector<8x128xf32>
    %43 = arith.divf %41, %42 : vector<8x128xf32>
    %c0_18 = arith.constant 0 : index
    %c0_19 = arith.constant 0 : index
    %44 = vector.load %arg12[%c0_18, %c0_19] : memref<8x128xf32, #tpu.memory_space<vmem>>, vector<8x128xf32>
    %45 = arith.mulf %35, %44 : vector<8x128xf32>
    %46 = arith.mulf %29, %37 : vector<8x128xf32>
    %47 = arith.addf %45, %46 : vector<8x128xf32>
    %48 = math.tanh %47 : vector<8x128xf32>
    %49 = arith.mulf %43, %48 : vector<8x128xf32>
    %c0_20 = arith.constant 0 : index
    %c0_21 = arith.constant 0 : index
    %50 = vector.load %arg11[%c0_20, %c0_21] : memref<8x128xf32, #tpu.memory_space<vmem>>, vector<8x128xf32>
    tpu.vector_store %arg11[%c0_20, %c0_21], %49 {strides = array<i32>} : memref<8x128xf32, #tpu.memory_space<vmem>>, vector<8x128xf32>,
    %c0_22 = arith.constant 0 : index
    %c0_23 = arith.constant 0 : index
    %51 = vector.load %arg12[%c0_22, %c0_23] : memref<8x128xf32, #tpu.memory_space<vmem>>, vector<8x128xf32>
    tpu.vector_store %arg12[%c0_22, %c0_23], %47 {strides = array<i32>} : memref<8x128xf32, #tpu.memory_space<vmem>>, vector<8x128xf32>,
    %c0_24 = arith.constant 0 : index
    %c0_25 = arith.constant 0 : index
    %52 = vector.load %arg8[%c0_24, %c0_25] : memref<128x128xf32, #tpu.memory_space<vmem>>, vector<128x128xf32>
    %cst_26 = arith.constant dense<0.000000e+00> : vector<8x128xf32>
    %53 = tpu.matmul %49, %52, %cst_26 {dimension_numbers = #tpu.dot_dimension_numbers<[1], [0], [0], [1], [0, 0, 1, 1], [], []>} : vector<8x128xf32>, vector<128x128xf32>, vector<8x128xf32> -> vector<8x128xf32>
    %c0_27 = arith.constant 0 : index
    %c0_28 = arith.constant 0 : index
    %54 = vector.load %arg9[%c0_27, %c0_28] : memref<1x128xf32, #tpu.memory_space<vmem>>, vector<1x128xf32>
    %55 = vector.broadcast %54 : vector<1x128xf32> to vector<8x128xf32>
    %56 = arith.addf %53, %55 : vector<8x128xf32>
    %c0_29 = arith.constant 0 : index
    %c0_30 = arith.constant 0 : index
    %c0_31 = arith.constant 0 : index
    %57 = vector.load %arg10[%c0_29, %c0_30, %c0_31] : memref<1x8x128xf32, #tpu.memory_space<vmem>>, vector<1x8x128xf32>
    %58 = vector.shape_cast %57 : vector<1x8x128xf32> to vector<8x128xf32>
    %59 = vector.shape_cast %56 : vector<8x128xf32> to vector<1x8x128xf32>
    tpu.vector_store %arg10[%c0_29, %c0_30, %c0_31], %59 {strides = array<i32>} : memref<1x8x128xf32, #tpu.memory_space<vmem>>, vector<1x8x128xf32>,
    %60 = tpu.iota {dimensions = array<i32: 1>} : vector<8x128xi32>
    %cst_32 = arith.constant dense<0xFF800000> : vector<8xf32>
    %61 = vector.multi_reduction <maximumf>, %56, %cst_32 [1] : vector<8x128xf32> to vector<8xf32>
    %62 = vector.shape_cast %61 : vector<8xf32> to vector<8x1xf32>
    %63 = vector.broadcast %62 : vector<8x1xf32> to vector<8x128xf32>
    %64 = arith.cmpf oeq, %56, %63 : vector<8x128xf32>
    %c128_i32 = arith.constant 128 : i32
    %65 = vector.broadcast %c128_i32 : i32 to vector<8x128xi32>
    %66 = arith.select %64, %60, %65 : vector<8x128xi1>, vector<8x128xi32>
    %cst_33 = arith.constant dense<2147483647> : vector<8xi32>
    %67 = vector.multi_reduction <minsi>, %66, %cst_33 [1] : vector<8x128xi32> to vector<8xi32>
    %68 = vector.shape_cast %67 : vector<8xi32> to vector<8x1xi32>
    %c0_34 = arith.constant 0 : index
    %c0_35 = arith.constant 0 : index
    %69 = vector.load %arg13[%c0_34, %c0_35] : memref<8x1xi32, #tpu.memory_space<vmem>>, vector<8x1xi32>
    tpu.vector_store %arg13[%c0_34, %c0_35], %68 {strides = array<i32>} : memref<8x1xi32, #tpu.memory_space<vmem>>, vector<8x1xi32>,
    return
  }
  func.func @transform_0(%arg0: i32, %arg1: memref<7xi32, #tpu.memory_space<smem>>) -> (i32, i32, i32) {
    %c0_i32 = arith.constant 0 : i32
    %c0_i32_0 = arith.constant 0 : i32
    %c0_i32_1 = arith.constant 0 : i32
    return %arg0, %c0_i32, %c0_i32_0 : i32, i32, i32
  }
  func.func @transform_1(%arg0: i32, %arg1: memref<7xi32, #tpu.memory_space<smem>>) -> (i32, i32) {
    %c0_i32 = arith.constant 0 : i32
    %c0_i32_0 = arith.constant 0 : i32
    %c0_i32_1 = arith.constant 0 : i32
    return %c0_i32, %c0_i32_0 : i32, i32
  }
  func.func @transform_2(%arg0: i32, %arg1: memref<7xi32, #tpu.memory_space<smem>>) -> (i32, i32) {
    %c0_i32 = arith.constant 0 : i32
    %c0_i32_0 = arith.constant 0 : i32
    %c0_i32_1 = arith.constant 0 : i32
    return %c0_i32, %c0_i32_0 : i32, i32
  }
  func.func @transform_3(%arg0: i32, %arg1: memref<7xi32, #tpu.memory_space<smem>>) -> (i32, i32) {
    %c0_i32 = arith.constant 0 : i32
    %c0_i32_0 = arith.constant 0 : i32
    %c0_i32_1 = arith.constant 0 : i32
    return %c0_i32, %c0_i32_0 : i32, i32
  }
  func.func @transform_4(%arg0: i32, %arg1: memref<7xi32, #tpu.memory_space<smem>>) -> (i32, i32) {
    %c0_i32 = arith.constant 0 : i32
    %c0_i32_0 = arith.constant 0 : i32
    %c0_i32_1 = arith.constant 0 : i32
    return %c0_i32, %c0_i32_0 : i32, i32
  }
  func.func @transform_5(%arg0: i32, %arg1: memref<7xi32, #tpu.memory_space<smem>>) -> (i32, i32) {
    %c0_i32 = arith.constant 0 : i32
    %c0_i32_0 = arith.constant 0 : i32
    %c0_i32_1 = arith.constant 0 : i32
    return %c0_i32, %c0_i32_0 : i32, i32
  }
  func.func @transform_6(%arg0: i32, %arg1: memref<7xi32, #tpu.memory_space<smem>>) -> (i32, i32) {
    %c0_i32 = arith.constant 0 : i32
    %c0_i32_0 = arith.constant 0 : i32
    %c0_i32_1 = arith.constant 0 : i32
    return %c0_i32, %c0_i32_0 : i32, i32
  }
  func.func @transform_7(%arg0: i32, %arg1: memref<7xi32, #tpu.memory_space<smem>>) -> (i32, i32) {
    %c0_i32 = arith.constant 0 : i32
    %c0_i32_0 = arith.constant 0 : i32
    %c0_i32_1 = arith.constant 0 : i32
    return %c0_i32, %c0_i32_0 : i32, i32
  }
  func.func @transform_8(%arg0: i32, %arg1: memref<7xi32, #tpu.memory_space<smem>>) -> (i32, i32, i32) {
    %c0_i32 = arith.constant 0 : i32
    %c0_i32_0 = arith.constant 0 : i32
    %c0_i32_1 = arith.constant 0 : i32
    return %arg0, %c0_i32, %c0_i32_0 : i32, i32, i32
  }
}

</mosaic_0001>

<llo_original>
// kernel: _seq2seq_device.2
$region0: #{_seq2seq_device.2}
  #allocation0 [shape = 'u32[]', space=smem, size = 0x4, offset = 0x4, fixed_abs, tag = 'smem constant byte address 0x4 - core index']
  #allocation1 [shape = 'u32[144,128]{1,0:T(1,128)}', space=vmem, size = 0x12000, scoped, tag = 'internal scratch']
  %s0 = inlined_call_operand.vmem [shape: f32[6,8,128], index: 0, kind: input, shape index: {}]
  %s1 = inlined_call_operand.vmem [shape: f32[256,512], index: 1, kind: input, shape index: {}]
  %s2 = inlined_call_operand.vmem [shape: f32[1,512], index: 2, kind: input, shape index: {}]
  %s3 = inlined_call_operand.vmem [shape: f32[8,128], index: 3, kind: output, shape index: {0}]
  %s4 = inlined_call_operand.vmem [shape: f32[8,128], index: 4, kind: output, shape index: {1}]
  %5 = xla_tuple %s3, %s4
  %s6 = sld [smem:[#allocation0]]
  $region57: #{_seq2seq_device.2} parent=0
    _
  %s8 = ssub.s32 1, %s6
  %s9 = scalar_select 0, %s8, %s6
  loop: start=0, step=1, limit=8
  $region2: #{_seq2seq_device.2} parent=0 // loop_pre_header
    _
  $region3: #{_seq2seq_device.2} parent=0 // loop_header
    %s11 = sphi 0, %s15
    %p12 = scmp.ge.s32.totalorder %s11, 8
    %s21 = sphi 0, %s23
    %s24 = sphi 0, %s21
    %s25 = sphi 0, %s24
    %s41 = sphi 0, %s25
    %s45 = sphi 0, %s45
    %s47 = sphi 0, %s45
    %s48 = sphi 0, %s47
    %s62 = sphi 0, %s48
    %s66 = sphi 0, %s66
    %s68 = sphi 0, %s66
    %s69 = sphi 0, %s68
    %s83 = sphi 0, %s69
    %s87 = sphi 0, %s87
    %s89 = sphi 0, %s87
    %s90 = sphi 0, %s89
    %s104 = sphi 0, %s90
    %s108 = sphi 0, %s108
    %s110 = sphi 0, %s108
    %s111 = sphi 0, %s110
    %s125 = sphi 0, %s111
  $region4: #{_seq2seq_device.2} parent=0 // loop_header_branch
    %14 = sbr.rel (%p12) target = $region8
  $region5: #{_seq2seq_device.2} parent=0 // loop_body
    %s16 = ssub.s32 %s11, 1
    %s17 = ssub.s32 %s11, 2
    %s18 = sadd.s32 %s11, 1
    %s19 = ssub.s32 %s11, %s18
    %p20 = scmp.eq.s32.totalorder %s19, 0
    %s22 = sadd.s32 %s21, 1
    %s23 = scalar_select %p20, %s21, %s22
    %p26 = pneg %p20
    %p27 = scmp.eq.s32.totalorder %s11, 5
    %p28 = por %p26, %p27
    %p29 = scmp.ne.s32.totalorder %s21, %s24
    %p30 = scmp.eq.s32.totalorder %s11, 0
    %p31 = por %p29, %p30
    %p32 = scmp.ne.s32.totalorder %s21, %s24
    %p33 = scmp.eq.s32.totalorder %s16, 5
    %p34 = por %p32, %p33
    %p35 = scmp.ne.s32.totalorder %s24, %s25
    %p36 = scmp.eq.s32.totalorder %s16, 0
    %p37 = por %p35, %p36
    %p38 = scmp.ne.s32.totalorder %s24, %s25
    %p39 = scmp.eq.s32.totalorder %s17, 5
    %p40 = por %p38, %p39
    %p42 = scmp.ne.s32.totalorder %s25, %s41
    %p43 = scmp.eq.s32.totalorder %s17, 0
    %p44 = por %p42, %p43
    %s46 = sadd.s32 %s45, 1
    %p49 = scmp.eq.s32.totalorder %s11, 5
    %p50 = scmp.ne.s32.totalorder %s45, %s47
    %p51 = scmp.eq.s32.totalorder %s11, 0
    %p52 = por %p50, %p51
    %p53 = scmp.ne.s32.totalorder %s45, %s47
    %p54 = scmp.eq.s32.totalorder %s16, 5
    %p55 = por %p53, %p54
    %p56 = scmp.ne.s32.totalorder %s47, %s48
    %p57 = scmp.eq.s32.totalorder %s16, 0
    %p58 = por %p56, %p57
    %p59 = scmp.ne.s32.totalorder %s47, %s48
    %p60 = scmp.eq.s32.totalorder %s17, 5
    %p61 = por %p59, %p60
    %p63 = scmp.ne.s32.totalorder %s48, %s62
    %p64 = scmp.eq.s32.totalorder %s17, 0
    %p65 = por %p63, %p64
    %s67 = sadd.s32 %s66, 1
    %p70 = scmp.eq.s32.totalorder %s11, 5
    %p71 = scmp.ne.s32.totalorder %s66, %s68
    %p72 = scmp.eq.s32.totalorder %s11, 0
    %p73 = por %p71, %p72
    %p74 = scmp.ne.s32.totalorder %s66, %s68
    %p75 = scmp.eq.s32.totalorder %s16, 5
    %p76 = por %p74, %p75
    %p77 = scmp.ne.s32.totalorder %s68, %s69
    %p78 = scmp.eq.s32.totalorder %s16, 0
    %p79 = por %p77, %p78
    %p80 = scmp.ne.s32.totalorder %s68, %s69
    %p81 = scmp.eq.s32.totalorder %s17, 5
    %p82 = por %p80, %p81
    %p84 = scmp.ne.s32.totalorder %s69, %s83
    %p85 = scmp.eq.s32.totalorder %s17, 0
    %p86 = por %p84, %p85
    %s88 = sadd.s32 %s87, 1
    %p91 = scmp.eq.s32.totalorder %s11, 5
    %p92 = scmp.ne.s32.totalorder %s87, %s89
    %p93 = scmp.eq.s32.totalorder %s11, 0
    %p94 = por %p92, %p93
    %p95 = scmp.ne.s32.totalorder %s87, %s89
    %p96 = scmp.eq.s32.totalorder %s16, 5
    %p97 = por %p95, %p96
    %p98 = scmp.ne.s32.totalorder %s89, %s90
    %p99 = scmp.eq.s32.totalorder %s16, 0
    %p100 = por %p98, %p99
    %p101 = scmp.ne.s32.totalorder %s89, %s90
    %p102 = scmp.eq.s32.totalorder %s17, 5
    %p103 = por %p101, %p102
    %p105 = scmp.ne.s32.totalorder %s90, %s104
    %p106 = scmp.eq.s32.totalorder %s17, 0
    %p107 = por %p105, %p106
    %s109 = sadd.s32 %s108, 1
    %p112 = scmp.eq.s32.totalorder %s11, 5
    %p113 = scmp.ne.s32.totalorder %s108, %s110
    %p114 = scmp.eq.s32.totalorder %s11, 0
    %p115 = por %p113, %p114
    %p116 = scmp.ne.s32.totalorder %s108, %s110
    %p117 = scmp.eq.s32.totalorder %s16, 5
    %p118 = por %p116, %p117
    %p119 = scmp.ne.s32.totalorder %s110, %s111
    %p120 = scmp.eq.s32.totalorder %s16, 0
    %p121 = por %p119, %p120
    %p122 = scmp.ne.s32.totalorder %s110, %s111
    %p123 = scmp.eq.s32.totalorder %s17, 5
    %p124 = por %p122, %p123
    %p126 = scmp.ne.s32.totalorder %s111, %s125
    %p127 = scmp.eq.s32.totalorder %s17, 0
    %p128 = por %p126, %p127
    %p129 = scmp.le.s32.totalorder 1, %s11
    %p130 = scmp.lt.s32.totalorder %s11, 7
    %p131 = pnand %p129, %p130
    %p132 = pneg %p131
    // Predicated region
    $region9: #{_seq2seq_device.2} parent=5 // pred_check
      _
    $region10: #{_seq2seq_device.2} parent=5 // pred_check_branch
      %134 = sbr.rel (%p131) target = $region12
    $region11: #{_seq2seq_device.2} parent=5 // pred_region
      %s135 = ssub.s32 %s11, 1
      // Predicated region
      $region13: #{_seq2seq_device.2} parent=11 // pred_check
        %p136 = pneg %p58
      $region14: #{_seq2seq_device.2} parent=11 // pred_check_branch
        %138 = sbr.rel (%p136) target = $region16
      $region15: #{_seq2seq_device.2} parent=11 // pred_region
        _
      $region16: #{_seq2seq_device.2} parent=11 // pred_fallthru
        _
      // Predicated region
      $region17: #{_seq2seq_device.2} parent=11 // pred_check
        %p139 = pneg %p79
      $region18: #{_seq2seq_device.2} parent=11 // pred_check_branch
        %141 = sbr.rel (%p139) target = $region20
      $region19: #{_seq2seq_device.2} parent=11 // pred_region
        _
      $region20: #{_seq2seq_device.2} parent=11 // pred_fallthru
        _
    $region12: #{_seq2seq_device.2} parent=5 // pred_fallthru
      _
    %p142 = scmp.lt.s32.totalorder %s11, 6
    // Predicated region
    $region21: #{_seq2seq_device.2} parent=5 // pred_check
      %p143 = pneg %p142
    $region22: #{_seq2seq_device.2} parent=5 // pred_check_branch
      %145 = sbr.rel (%p143) target = $region24
    $region23: #{_seq2seq_device.2} parent=5 // pred_region
      // Predicated region
      $region25: #{_seq2seq_device.2} parent=23 // pred_check
        %p146 = pneg %p31
      $region26: #{_seq2seq_device.2} parent=23 // pred_check_branch
        %148 = sbr.rel (%p146) target = $region28
      $region27: #{_seq2seq_device.2} parent=23 // pred_region
        %p149 = scmp.lt.s32.totalorder %s11, 5
        %s150 = scalar_select %p149, %s11, 5
        %s151 = smul.addr %s150, 8
        %s152 = scalar_lea.vmem %s0, %s151
      $region28: #{_seq2seq_device.2} parent=23 // pred_fallthru
        _
    $region24: #{_seq2seq_device.2} parent=5 // pred_fallthru
      _
    %p153 = scmp.le.s32.totalorder 1, %s11
    %p154 = scmp.lt.s32.totalorder %s11, 7
    %p155 = pnand %p153, %p154
    %p156 = pneg %p155
    // Predicated region
    $region29: #{_seq2seq_device.2} parent=5 // pred_check
      _
    $region30: #{_seq2seq_device.2} parent=5 // pred_check_branch
      %158 = sbr.rel (%p155) target = $region32
    $region31: #{_seq2seq_device.2} parent=5 // pred_region
      %s159 = ssub.s32 %s11, 1
      %p160 = scmp.lt.s32.totalorder %s16, 5
      %s161 = scalar_select %p160, %s16, 5
      %s162 = smul.addr %s161, 8
      %s163 = scalar_lea.vmem %s0, %s162
      %p164 = pneg %p37
      %p165 = pneg %p34
      %p166 = pneg %p58
      %p167 = pneg %p55
      %p168 = pneg %p79
      %p169 = pneg %p76
      %p170 = pneg %p100
      %p171 = pneg %p97
      %p172 = pneg %p121
      %p173 = pneg %p118
      %p174 = scmp.lt.s32.totalorder %s16, 5
      %s175 = scalar_select %p174, %s16, 5
      %s176 = smul.addr %s175, 8
      %s177 = scalar_lea.vmem %s0, %s176
      %p178 = scmp.eq.s32.totalorder %s16, 0
      // Predicated region
      $region33: #{_seq2seq_device.2} parent=31 // pred_check
        %p179 = pneg %p178
      $region34: #{_seq2seq_device.2} parent=31 // pred_check_branch
        %181 = sbr.rel (%p179) target = $region36
      $region35: #{_seq2seq_device.2} parent=31 // pred_region
        %182 = vst [vmem:[%s3] sm:$0xff] 0.0
        %183 = vst [vmem:[%s4] sm:$0xff] 0.0
      $region36: #{_seq2seq_device.2} parent=31 // pred_fallthru
        _
      %v184 = vld [vmem:[%s177] sm:$0xff]
      %v185 = vld [vmem:[%s3] sm:$0xff]
      %v186 = vld [vmem:[%s4] sm:$0xff]
      %v187 = vld [vmem:[%s1] sm:$0xff]
      %v188 = vld [vmem:[%s1 + $0x8] sm:$0xff]
      %v189 = vld [vmem:[%s1 + $0x10] sm:$0xff]
      %v190 = vld [vmem:[%s1 + $0x18] sm:$0xff]
      %v191 = vld [vmem:[%s1 + $0x20] sm:$0xff]
      %v192 = vld [vmem:[%s1 + $0x28] sm:$0xff]
      %v193 = vld [vmem:[%s1 + $0x30] sm:$0xff]
      %v194 = vld [vmem:[%s1 + $0x38] sm:$0xff]
      %v195 = vld [vmem:[%s1 + $0x40] sm:$0xff]
      %v196 = vld [vmem:[%s1 + $0x48] sm:$0xff]
      %v197 = vld [vmem:[%s1 + $0x50] sm:$0xff]
      %v198 = vld [vmem:[%s1 + $0x58] sm:$0xff]
      %v199 = vld [vmem:[%s1 + $0x60] sm:$0xff]
      %v200 = vld [vmem:[%s1 + $0x68] sm:$0xff]
      %v201 = vld [vmem:[%s1 + $0x70] sm:$0xff]
      %v202 = vld [vmem:[%s1 + $0x78] sm:$0xff]
      %v203 = vld [vmem:[%s1 + $0x80] sm:$0xff]
      %v204 = vld [vmem:[%s1 + $0x88] sm:$0xff]
      %v205 = vld [vmem:[%s1 + $0x90] sm:$0xff]
      %v206 = vld [vmem:[%s1 + $0x98] sm:$0xff]
      %v207 = vld [vmem:[%s1 + $0xa0] sm:$0xff]
      %v208 = vld [vmem:[%s1 + $0xa8] sm:$0xff]
      %v209 = vld [vmem:[%s1 + $0xb0] sm:$0xff]
      %v210 = vld [vmem:[%s1 + $0xb8] sm:$0xff]
      %v211 = vld [vmem:[%s1 + $0xc0] sm:$0xff]
      %v212 = vld [vmem:[%s1 + $0xc8] sm:$0xff]
      %v213 = vld [vmem:[%s1 + $0xd0] sm:$0xff]
      %v214 = vld [vmem:[%s1 + $0xd8] sm:$0xff]
      %v215 = vld [vmem:[%s1 + $0xe0] sm:$0xff]
      %v216 = vld [vmem:[%s1 + $0xe8] sm:$0xff]
      %v217 = vld [vmem:[%s1 + $0xf0] sm:$0xff]
      %v218 = vld [vmem:[%s1 + $0xf8] sm:$0xff]
      %v219 = vld [vmem:[%s1 + $0x100] sm:$0xff]
      %v220 = vld [vmem:[%s1 + $0x108] sm:$0xff]
      %v221 = vld [vmem:[%s1 + $0x110] sm:$0xff]
      %v222 = vld [vmem:[%s1 + $0x118] sm:$0xff]
      %v223 = vld [vmem:[%s1 + $0x120] sm:$0xff]
      %v224 = vld [vmem:[%s1 + $0x128] sm:$0xff]
      %v225 = vld [vmem:[%s1 + $0x130] sm:$0xff]
      %v226 = vld [vmem:[%s1 + $0x138] sm:$0xff]
      %v227 = vld [vmem:[%s1 + $0x140] sm:$0xff]
      %v228 = vld [vmem:[%s1 + $0x148] sm:$0xff]
      %v229 = vld [vmem:[%s1 + $0x150] sm:$0xff]
      %v230 = vld [vmem:[%s1 + $0x158] sm:$0xff]
      %v231 = vld [vmem:[%s1 + $0x160] sm:$0xff]
      %v232 = vld [vmem:[%s1 + $0x168] sm:$0xff]
      %v233 = vld [vmem:[%s1 + $0x170] sm:$0xff]
      %v234 = vld [vmem:[%s1 + $0x178] sm:$0xff]
      %v235 = vld [vmem:[%s1 + $0x180] sm:$0xff]
      %v236 = vld [vmem:[%s1 + $0x188] sm:$0xff]
      %v237 = vld [vmem:[%s1 + $0x190] sm:$0xff]
      %v238 = vld [vmem:[%s1 + $0x198] sm:$0xff]
      %v239 = vld [vmem:[%s1 + $0x1a0] sm:$0xff]
      %v240 = vld [vmem:[%s1 + $0x1a8] sm:$0xff]
      %v241 = vld [vmem:[%s1 + $0x1b0] sm:$0xff]
      %v242 = vld [vmem:[%s1 + $0x1b8] sm:$0xff]
      %v243 = vld [vmem:[%s1 + $0x1c0] sm:$0xff]
      %v244 = vld [vmem:[%s1 + $0x1c8] sm:$0xff]
      %v245 = vld [vmem:[%s1 + $0x1d0] sm:$0xff]
      %v246 = vld [vmem:[%s1 + $0x1d8] sm:$0xff]
      %v247 = vld [vmem:[%s1 + $0x1e0] sm:$0xff]
      %v248 = vld [vmem:[%s1 + $0x1e8] sm:$0xff]
      %v249 = vld [vmem:[%s1 + $0x1f0] sm:$0xff]
      %v250 = vld [vmem:[%s1 + $0x1f8] sm:$0xff]
      %v251 = vld [vmem:[%s1 + $0x200] sm:$0xff]
      %v252 = vld [vmem:[%s1 + $0x208] sm:$0xff]
      %v253 = vld [vmem:[%s1 + $0x210] sm:$0xff]
      %v254 = vld [vmem:[%s1 + $0x218] sm:$0xff]
      %v255 = vld [vmem:[%s1 + $0x220] sm:$0xff]
      %v256 = vld [vmem:[%s1 + $0x228] sm:$0xff]
      %v257 = vld [vmem:[%s1 + $0x230] sm:$0xff]
      %v258 = vld [vmem:[%s1 + $0x238] sm:$0xff]
      %v259 = vld [vmem:[%s1 + $0x240] sm:$0xff]
      %v260 = vld [vmem:[%s1 + $0x248] sm:$0xff]
      %v261 = vld [vmem:[%s1 + $0x250] sm:$0xff]
      %v262 = vld [vmem:[%s1 + $0x258] sm:$0xff]
      %v263 = vld [vmem:[%s1 + $0x260] sm:$0xff]
      %v264 = vld [vmem:[%s1 + $0x268] sm:$0xff]
      %v265 = vld [vmem:[%s1 + $0x270] sm:$0xff]
      %v266 = vld [vmem:[%s1 + $0x278] sm:$0xff]
      %v267 = vld [vmem:[%s1 + $0x280] sm:$0xff]
      %v268 = vld [vmem:[%s1 + $0x288] sm:$0xff]
      %v269 = vld [vmem:[%s1 + $0x290] sm:$0xff]
      %v270 = vld [vmem:[%s1 + $0x298] sm:$0xff]
      %v271 = vld [vmem:[%s1 + $0x2a0] sm:$0xff]
      %v272 = vld [vmem:[%s1 + $0x2a8] sm:$0xff]
      %v273 = vld [vmem:[%s1 + $0x2b0] sm:$0xff]
      %v274 = vld [vmem:[%s1 + $0x2b8] sm:$0xff]
      %v275 = vld [vmem:[%s1 + $0x2c0] sm:$0xff]
      %v276 = vld [vmem:[%s1 + $0x2c8] sm:$0xff]
      %v277 = vld [vmem:[%s1 + $0x2d0] sm:$0xff]
      %v278 = vld [vmem:[%s1 + $0x2d8] sm:$0xff]
      %v279 = vld [vmem:[%s1 + $0x2e0] sm:$0xff]
      %v280 = vld [vmem:[%s1 + $0x2e8] sm:$0xff]
      %v281 = vld [vmem:[%s1 + $0x2f0] sm:$0xff]
      %v282 = vld [vmem:[%s1 + $0x2f8] sm:$0xff]
      %v283 = vld [vmem:[%s1 + $0x300] sm:$0xff]
      %v284 = vld [vmem:[%s1 + $0x308] sm:$0xff]
      %v285 = vld [vmem:[%s1 + $0x310] sm:$0xff]
      %v286 = vld [vmem:[%s1 + $0x318] sm:$0xff]
      %v287 = vld [vmem:[%s1 + $0x320] sm:$0xff]
      %v288 = vld [vmem:[%s1 + $0x328] sm:$0xff]
      %v289 = vld [vmem:[%s1 + $0x330] sm:$0xff]
      %v290 = vld [vmem:[%s1 + $0x338] sm:$0xff]
      %v291 = vld [vmem:[%s1 + $0x340] sm:$0xff]
      %v292 = vld [vmem:[%s1 + $0x348] sm:$0xff]
      %v293 = vld [vmem:[%s1 + $0x350] sm:$0xff]
      %v294 = vld [vmem:[%s1 + $0x358] sm:$0xff]
      %v295 = vld [vmem:[%s1 + $0x360] sm:$0xff]
      %v296 = vld [vmem:[%s1 + $0x368] sm:$0xff]
      %v297 = vld [vmem:[%s1 + $0x370] sm:$0xff]
      %v298 = vld [vmem:[%s1 + $0x378] sm:$0xff]
      %v299 = vld [vmem:[%s1 + $0x380] sm:$0xff]
      %v300 = vld [vmem:[%s1 + $0x388] sm:$0xff]
      %v301 = vld [vmem:[%s1 + $0x390] sm:$0xff]
      %v302 = vld [vmem:[%s1 + $0x398] sm:$0xff]
      %v303 = vld [vmem:[%s1 + $0x3a0] sm:$0xff]
      %v304 = vld [vmem:[%s1 + $0x3a8] sm:$0xff]
      %v305 = vld [vmem:[%s1 + $0x3b0] sm:$0xff]
      %v306 = vld [vmem:[%s1 + $0x3b8] sm:$0xff]
      %v307 = vld [vmem:[%s1 + $0x3c0] sm:$0xff]
      %v308 = vld [vmem:[%s1 + $0x3c8] sm:$0xff]
      %v309 = vld [vmem:[%s1 + $0x3d0] sm:$0xff]
      %v310 = vld [vmem:[%s1 + $0x3d8] sm:$0xff]
      %v311 = vld [vmem:[%s1 + $0x3e0] sm:$0xff]
      %v312 = vld [vmem:[%s1 + $0x3e8] sm:$0xff]
      %v313 = vld [vmem:[%s1 + $0x3f0] sm:$0xff]
      %v314 = vld [vmem:[%s1 + $0x3f8] sm:$0xff]
      %v315 = vld [vmem:[%s2] sm:$0xf]
      %v317 = vlaneseq
      %v318 = vshrl.u32 %v317, 7
      %v319 = vsub.s32 0, %v318
      %v320 = vrot.slane %v315, %v319
      %v321 = vlaneseq
      %v322 = vshrl.u32 %v321, 7
      %v323 = vsub.s32 1, %v322
      %v324 = vrot.slane %v315, %v323
      %v325 = vlaneseq
      %v326 = vshrl.u32 %v325, 7
      %v327 = vsub.s32 2, %v326
      %v328 = vrot.slane %v315, %v327
      %v329 = vlaneseq
      %v330 = vshrl.u32 %v329, 7
      %v331 = vsub.s32 3, %v330
      %v332 = vrot.slane %v315, %v331
      %337 = vmatprep.subr.mxu0 %v188
      %338 = vmatpush1.msra.mxu0 %v187
      %339 = vmatprep.subr.mxu0 %v192
      %340 = vmatpush1.msra.mxu0 %v191
      %341 = vmatprep.subr.mxu0 %v196
      %342 = vmatpush1.msra.mxu0 %v195
      %343 = vmatprep.subr.mxu0 %v200
      %344 = vmatpush1.msra.mxu0 %v199
      %345 = vmatprep.subr.mxu0 %v204
      %346 = vmatpush1.msra.mxu0 %v203
      %347 = vmatprep.subr.mxu0 %v208
      %348 = vmatpush1.msra.mxu0 %v207
      %349 = vmatprep.subr.mxu0 %v212
      %350 = vmatpush1.msra.mxu0 %v211
      %351 = vmatprep.subr.mxu0 %v216
      %352 = vmatpush1.msra.mxu0 %v215
      %353 = vmatprep.subr.mxu0 %v220
      %354 = vmatpush1.msra.mxu0 %v219
      %355 = vmatprep.subr.mxu0 %v224
      %356 = vmatpush1.msra.mxu0 %v223
      %357 = vmatprep.subr.mxu0 %v228
      %358 = vmatpush1.msra.mxu0 %v227
      %359 = vmatprep.subr.mxu0 %v232
      %360 = vmatpush1.msra.mxu0 %v231
      %361 = vmatprep.subr.mxu0 %v236
      %362 = vmatpush1.msra.mxu0 %v235
      %363 = vmatprep.subr.mxu0 %v240
      %364 = vmatpush1.msra.mxu0 %v239
      %365 = vmatprep.subr.mxu0 %v244
      %366 = vmatpush1.msra.mxu0 %v243
      %367 = vmatprep.subr.mxu0 %v248
      %368 = vmatpush1.msra.mxu0 %v247
      %369 = vmatprep.subr.mxu0 %v252
      %370 = vmatpush1.msra.mxu0 %v251
      %371 = vmatprep.subr.mxu0 %v256
      %372 = vmatpush1.msra.mxu0 %v255
      %373 = vmatprep.subr.mxu0 %v260
      %374 = vmatpush1.msra.mxu0 %v259
      %375 = vmatprep.subr.mxu0 %v264
      %376 = vmatpush1.msra.mxu0 %v263
      %377 = vmatprep.subr.mxu0 %v268
      %378 = vmatpush1.msra.mxu0 %v267
      %379 = vmatprep.subr.mxu0 %v272
      %380 = vmatpush1.msra.mxu0 %v271
      %381 = vmatprep.subr.mxu0 %v276
      %382 = vmatpush1.msra.mxu0 %v275
      %383 = vmatprep.subr.mxu0 %v280
      %384 = vmatpush1.msra.mxu0 %v279
      %385 = vmatprep.subr.mxu0 %v284
      %386 = vmatpush1.msra.mxu0 %v283
      %387 = vmatprep.subr.mxu0 %v288
      %388 = vmatpush1.msra.mxu0 %v287
      %389 = vmatprep.subr.mxu0 %v292
      %390 = vmatpush1.msra.mxu0 %v291
      %391 = vmatprep.subr.mxu0 %v296
      %392 = vmatpush1.msra.mxu0 %v295
      %393 = vmatprep.subr.mxu0 %v300
      %394 = vmatpush1.msra.mxu0 %v299
      %395 = vmatprep.subr.mxu0 %v304
      %396 = vmatpush1.msra.mxu0 %v303
      %397 = vmatprep.subr.mxu0 %v308
      %398 = vmatpush1.msra.mxu0 %v307
      %399 = vmatprep.subr.mxu0 %v312
      %400 = vmatpush1.msra.mxu0 %v311
      %401 = vmatprep.mubr.f32.mxu0 %v185
      %402 = vmatmul.mubr.f32.gmra.mrb[0].mxu0 %v184
      %v403 = vpop.f32.mrb[0].mxu0
      %v404 = vadd.f32 %v320, %v403
      %v405 = vpop.f32.mrb[0].mxu0
      %v406 = vadd.f32 %v324, %v405
      %407 = vdwg.mxu0
      %408 = vmatprep.subr.mxu0 %v190
      %409 = vmatpush1.msra.mxu0 %v189
      %410 = vmatprep.subr.mxu0 %v194
      %411 = vmatpush1.msra.mxu0 %v193
      %412 = vmatprep.subr.mxu0 %v198
      %413 = vmatpush1.msra.mxu0 %v197
      %414 = vmatprep.subr.mxu0 %v202
      %415 = vmatpush1.msra.mxu0 %v201
      %416 = vmatprep.subr.mxu0 %v206
      %417 = vmatpush1.msra.mxu0 %v205
      %418 = vmatprep.subr.mxu0 %v210
      %419 = vmatpush1.msra.mxu0 %v209
      %420 = vmatprep.subr.mxu0 %v214
      %421 = vmatpush1.msra.mxu0 %v213
      %422 = vmatprep.subr.mxu0 %v218
      %423 = vmatpush1.msra.mxu0 %v217
      %424 = vmatprep.subr.mxu0 %v222
      %425 = vmatpush1.msra.mxu0 %v221
      %426 = vmatprep.subr.mxu0 %v226
      %427 = vmatpush1.msra.mxu0 %v225
      %428 = vmatprep.subr.mxu0 %v230
      %429 = vmatpush1.msra.mxu0 %v229
      %430 = vmatprep.subr.mxu0 %v234
      %431 = vmatpush1.msra.mxu0 %v233
      %432 = vmatprep.subr.mxu0 %v238
      %433 = vmatpush1.msra.mxu0 %v237
      %434 = vmatprep.subr.mxu0 %v242
      %435 = vmatpush1.msra.mxu0 %v241
      %436 = vmatprep.subr.mxu0 %v246
      %437 = vmatpush1.msra.mxu0 %v245
      %438 = vmatprep.subr.mxu0 %v250
      %439 = vmatpush1.msra.mxu0 %v249
      %440 = vmatprep.subr.mxu0 %v254
      %441 = vmatpush1.msra.mxu0 %v253
      %442 = vmatprep.subr.mxu0 %v258
      %443 = vmatpush1.msra.mxu0 %v257
      %444 = vmatprep.subr.mxu0 %v262
      %445 = vmatpush1.msra.mxu0 %v261
      %446 = vmatprep.subr.mxu0 %v266
      %447 = vmatpush1.msra.mxu0 %v265
      %448 = vmatprep.subr.mxu0 %v270
      %449 = vmatpush1.msra.mxu0 %v269
      %450 = vmatprep.subr.mxu0 %v274
      %451 = vmatpush1.msra.mxu0 %v273
      %452 = vmatprep.subr.mxu0 %v278
      %453 = vmatpush1.msra.mxu0 %v277
      %454 = vmatprep.subr.mxu0 %v282
      %455 = vmatpush1.msra.mxu0 %v281
      %456 = vmatprep.subr.mxu0 %v286
      %457 = vmatpush1.msra.mxu0 %v285
      %458 = vmatprep.subr.mxu0 %v290
      %459 = vmatpush1.msra.mxu0 %v289
      %460 = vmatprep.subr.mxu0 %v294
      %461 = vmatpush1.msra.mxu0 %v293
      %462 = vmatprep.subr.mxu0 %v298
      %463 = vmatpush1.msra.mxu0 %v297
      %464 = vmatprep.subr.mxu0 %v302
      %465 = vmatpush1.msra.mxu0 %v301
      %466 = vmatprep.subr.mxu0 %v306
      %467 = vmatpush1.msra.mxu0 %v305
      %468 = vmatprep.subr.mxu0 %v310
      %469 = vmatpush1.msra.mxu0 %v309
      %470 = vmatprep.subr.mxu0 %v314
      %471 = vmatpush1.msra.mxu0 %v313
      %472 = vmatprep.mubr.f32.mxu0 %v185
      %473 = vmatmul.mubr.f32.gmra.mrb[0].mxu0 %v184
      %v474 = vpop.f32.mrb[0].mxu0
      %v475 = vadd.f32 %v328, %v474
      %v476 = vpop.f32.mrb[0].mxu0
      %v477 = vadd.f32 %v332, %v476
      %478 = vdwg.mxu0
      %v479 = vxor.u32 %v404, 2147483648
      %v480 = vmul.f32 %v479, 1.442695
      %v481 = vpow.pop %v480
      %v482 = vadd.f32 %v481, 1.0
      %v483 = vrcp.pop %v482
      %v484 = vmul.f32 1.0, %v483
      %v485 = vxor.u32 %v406, 2147483648
      %v486 = vmul.f32 %v485, 1.442695
      %v487 = vpow.pop %v486
      %v488 = vadd.f32 %v487, 1.0
      %v489 = vrcp.pop %v488
      %v490 = vmul.f32 1.0, %v489
      %v491 = vtanh.pop %v475
      %v492 = vxor.u32 %v477, 2147483648
      %v493 = vmul.f32 %v492, 1.442695
      %v494 = vpow.pop %v493
      %v495 = vadd.f32 %v494, 1.0
      %v496 = vrcp.pop %v495
      %v497 = vmul.f32 1.0, %v496
      %v498 = vmul.f32 %v490, %v186
      %v499 = vmul.f32 %v484, %v491
      %v500 = vadd.f32 %v498, %v499
      %v501 = vtanh.pop %v500
      %v502 = vmul.f32 %v497, %v501
      %503 = vst [vmem:[%s3] sm:$0xff] %v502
      %504 = vst [vmem:[%s4] sm:$0xff] %v500
      // Predicated region
      $region37: #{_seq2seq_device.2} parent=31 // pred_check
        %p505 = pneg %p97
      $region38: #{_seq2seq_device.2} parent=31 // pred_check_branch
        %507 = sbr.rel (%p505) target = $region40
      $region39: #{_seq2seq_device.2} parent=31 // pred_region
        _
      $region40: #{_seq2seq_device.2} parent=31 // pred_fallthru
        _
      // Predicated region
      $region41: #{_seq2seq_device.2} parent=31 // pred_check
        %p508 = pneg %p118
      $region42: #{_seq2seq_device.2} parent=31 // pred_check_branch
        %510 = sbr.rel (%p508) target = $region44
      $region43: #{_seq2seq_device.2} parent=31 // pred_region
        _
      $region44: #{_seq2seq_device.2} parent=31 // pred_fallthru
        _
      // Predicated region
      $region45: #{_seq2seq_device.2} parent=31 // pred_check
        %p511 = pneg %p97
      $region46: #{_seq2seq_device.2} parent=31 // pred_check_branch
        %513 = sbr.rel (%p511) target = $region48
      $region47: #{_seq2seq_device.2} parent=31 // pred_region
        _
      $region48: #{_seq2seq_device.2} parent=31 // pred_fallthru
        _
      // Predicated region
      $region49: #{_seq2seq_device.2} parent=31 // pred_check
        %p514 = pneg %p118
      $region50: #{_seq2seq_device.2} parent=31 // pred_check_branch
        %516 = sbr.rel (%p514) target = $region52
      $region51: #{_seq2seq_device.2} parent=31 // pred_region
        _
      $region52: #{_seq2seq_device.2} parent=31 // pred_fallthru
        _
    $region32: #{_seq2seq_device.2} parent=5 // pred_fallthru
      _
    %p517 = scmp.le.s32.totalorder 2, %s11
    // Predicated region
    $region53: #{_seq2seq_device.2} parent=5 // pred_check
      %p518 = pneg %p517
    $region54: #{_seq2seq_device.2} parent=5 // pred_check_branch
      %520 = sbr.rel (%p518) target = $region56
    $region55: #{_seq2seq_device.2} parent=5 // pred_region
      %s521 = ssub.s32 %s11, 2
    $region56: #{_seq2seq_device.2} parent=5 // pred_fallthru
      _
  $region6: #{_seq2seq_device.2} parent=0 // loop_footer
    %s15 = sadd.s32 1, %s11
  $region7: #{_seq2seq_device.2} parent=0 // loop_footer_branch
    %10 = sbr.rel target = $region3
  $region8: #{_seq2seq_device.2} parent=0 // loop_exit
    _

// kernel: _seq2seq_device.3
$region0: #{_seq2seq_device.3}
  #allocation0 [shape = 'u32[]', space=smem, size = 0x4, offset = 0x4, fixed_abs, tag = 'smem constant byte address 0x4 - core index']
  #allocation1 [shape = 'u32[144,128]{1,0:T(1,128)}', space=vmem, size = 0x12000, scoped, tag = 'internal scratch']
  #allocation2 [shape = 'f32[8,128]{1,0:T(8,128)}', space=vmem, size = 0x1000, scoped, tag = 'scratch operand']
  #allocation3 [shape = 'f32[8,128]{1,0:T(8,128)}', space=vmem, size = 0x1000, scoped, tag = 'scratch operand']
  #allocation4 [shape = 's32[8,1]{1,0:T(8,128)}', space=vmem, size = 0x1000, scoped, tag = 'scratch operand']
  #allocation5 [shape = 's32[1]{0}', space=sflag, size = 0x4, scoped, tag = 'scoped memory for _seq2seq_device.3']
  #allocation6 [shape = 'u8[512]{0}', space=smem, size = 0x200, scoped, tag = 'prefetched SMEM operand 0']
  %s0 = inlined_call_operand.vmem [shape: s32[7], index: 0, kind: input, shape index: {}]
  %s1 = inlined_call_operand.vmem [shape: f32[7,8,128], index: 1, kind: input, shape index: {}]
  %s2 = inlined_call_operand.vmem [shape: f32[8,128], index: 2, kind: input, shape index: {}]
  %s3 = inlined_call_operand.vmem [shape: f32[8,128], index: 3, kind: input, shape index: {}]
  %s4 = inlined_call_operand.vmem [shape: f32[48,128], index: 4, kind: input, shape index: {}]
  %s5 = inlined_call_operand.vmem [shape: f32[256,512], index: 5, kind: input, shape index: {}]
  %s6 = inlined_call_operand.vmem [shape: f32[1,512], index: 6, kind: input, shape index: {}]
  %s7 = inlined_call_operand.vmem [shape: f32[128,128], index: 7, kind: input, shape index: {}]
  %s8 = inlined_call_operand.vmem [shape: f32[1,128], index: 8, kind: input, shape index: {}]
  %s9 = inlined_call_operand.vmem [shape: f32[7,8,128], index: 9, kind: output, shape index: {}]
  %s10 = sld [smem:[#allocation0]]
  $region69: #{_seq2seq_device.3} parent=0
    _
  %s12 = ssub.s32 1, %s10
  %s13 = scalar_select 0, %s12, %s10
  %s14 = sshll.u32 %s0, 4
  %s15 = int_to_ptr.vmem [resolvable:$true] %s14
  %17 = dma.vmem_to_smem %s15, 16, [#allocation6], [#allocation5]
  %18 = dma.done [#allocation5], 16
  %19 = sfence
  loop: start=0, step=1, limit=9
  $region2: #{_seq2seq_device.3} parent=0 // loop_pre_header
    _
  $region3: #{_seq2seq_device.3} parent=0 // loop_header
    %s21 = sphi 0, %s25
    %p22 = scmp.ge.s32.totalorder %s21, 9
    %s31 = sphi 0, %s33
    %s34 = sphi 0, %s31
    %s35 = sphi 0, %s34
    %s51 = sphi 0, %s35
    %s55 = sphi 0, %s55
    %s57 = sphi 0, %s55
    %s58 = sphi 0, %s57
    %s72 = sphi 0, %s58
    %s76 = sphi 0, %s76
    %s78 = sphi 0, %s76
    %s79 = sphi 0, %s78
    %s93 = sphi 0, %s79
    %s97 = sphi 0, %s97
    %s99 = sphi 0, %s97
    %s100 = sphi 0, %s99
    %s114 = sphi 0, %s100
    %s118 = sphi 0, %s118
    %s120 = sphi 0, %s118
    %s121 = sphi 0, %s120
    %s135 = sphi 0, %s121
    %s139 = sphi 0, %s139
    %s141 = sphi 0, %s139
    %s142 = sphi 0, %s141
    %s156 = sphi 0, %s142
    %s160 = sphi 0, %s160
    %s162 = sphi 0, %s160
    %s163 = sphi 0, %s162
    %s177 = sphi 0, %s163
    %s181 = sphi 0, %s181
    %s183 = sphi 0, %s181
    %s184 = sphi 0, %s183
    %s198 = sphi 0, %s184
    %s204 = sphi 0, %s206
    %s207 = sphi 0, %s204
    %s208 = sphi 0, %s207
    %s224 = sphi 0, %s208
  $region4: #{_seq2seq_device.3} parent=0 // loop_header_branch
    %24 = sbr.rel (%p22) target = $region8
  $region5: #{_seq2seq_device.3} parent=0 // loop_body
    %s26 = ssub.s32 %s21, 1
    %s27 = ssub.s32 %s21, 2
    %s28 = sadd.s32 %s21, 1
    %s29 = ssub.s32 %s21, %s28
    %p30 = scmp.eq.s32.totalorder %s29, 0
    %s32 = sadd.s32 %s31, 1
    %s33 = scalar_select %p30, %s31, %s32
    %p36 = pneg %p30
    %p37 = scmp.eq.s32.totalorder %s21, 6
    %p38 = por %p36, %p37
    %p39 = scmp.ne.s32.totalorder %s31, %s34
    %p40 = scmp.eq.s32.totalorder %s21, 0
    %p41 = por %p39, %p40
    %p42 = scmp.ne.s32.totalorder %s31, %s34
    %p43 = scmp.eq.s32.totalorder %s26, 6
    %p44 = por %p42, %p43
    %p45 = scmp.ne.s32.totalorder %s34, %s35
    %p46 = scmp.eq.s32.totalorder %s26, 0
    %p47 = por %p45, %p46
    %p48 = scmp.ne.s32.totalorder %s34, %s35
    %p49 = scmp.eq.s32.totalorder %s27, 6
    %p50 = por %p48, %p49
    %p52 = scmp.ne.s32.totalorder %s35, %s51
    %p53 = scmp.eq.s32.totalorder %s27, 0
    %p54 = por %p52, %p53
    %s56 = sadd.s32 %s55, 1
    %p59 = scmp.eq.s32.totalorder %s21, 6
    %p60 = scmp.ne.s32.totalorder %s55, %s57
    %p61 = scmp.eq.s32.totalorder %s21, 0
    %p62 = por %p60, %p61
    %p63 = scmp.ne.s32.totalorder %s55, %s57
    %p64 = scmp.eq.s32.totalorder %s26, 6
    %p65 = por %p63, %p64
    %p66 = scmp.ne.s32.totalorder %s57, %s58
    %p67 = scmp.eq.s32.totalorder %s26, 0
    %p68 = por %p66, %p67
    %p69 = scmp.ne.s32.totalorder %s57, %s58
    %p70 = scmp.eq.s32.totalorder %s27, 6
    %p71 = por %p69, %p70
    %p73 = scmp.ne.s32.totalorder %s58, %s72
    %p74 = scmp.eq.s32.totalorder %s27, 0
    %p75 = por %p73, %p74
    %s77 = sadd.s32 %s76, 1
    %p80 = scmp.eq.s32.totalorder %s21, 6
    %p81 = scmp.ne.s32.totalorder %s76, %s78
    %p82 = scmp.eq.s32.totalorder %s21, 0
    %p83 = por %p81, %p82
    %p84 = scmp.ne.s32.totalorder %s76, %s78
    %p85 = scmp.eq.s32.totalorder %s26, 6
    %p86 = por %p84, %p85
    %p87 = scmp.ne.s32.totalorder %s78, %s79
    %p88 = scmp.eq.s32.totalorder %s26, 0
    %p89 = por %p87, %p88
    %p90 = scmp.ne.s32.totalorder %s78, %s79
    %p91 = scmp.eq.s32.totalorder %s27, 6
    %p92 = por %p90, %p91
    %p94 = scmp.ne.s32.totalorder %s79, %s93
    %p95 = scmp.eq.s32.totalorder %s27, 0
    %p96 = por %p94, %p95
    %s98 = sadd.s32 %s97, 1
    %p101 = scmp.eq.s32.totalorder %s21, 6
    %p102 = scmp.ne.s32.totalorder %s97, %s99
    %p103 = scmp.eq.s32.totalorder %s21, 0
    %p104 = por %p102, %p103
    %p105 = scmp.ne.s32.totalorder %s97, %s99
    %p106 = scmp.eq.s32.totalorder %s26, 6
    %p107 = por %p105, %p106
    %p108 = scmp.ne.s32.totalorder %s99, %s100
    %p109 = scmp.eq.s32.totalorder %s26, 0
    %p110 = por %p108, %p109
    %p111 = scmp.ne.s32.totalorder %s99, %s100
    %p112 = scmp.eq.s32.totalorder %s27, 6
    %p113 = por %p111, %p112
    %p115 = scmp.ne.s32.totalorder %s100, %s114
    %p116 = scmp.eq.s32.totalorder %s27, 0
    %p117 = por %p115, %p116
    %s119 = sadd.s32 %s118, 1
    %p122 = scmp.eq.s32.totalorder %s21, 6
    %p123 = scmp.ne.s32.totalorder %s118, %s120
    %p124 = scmp.eq.s32.totalorder %s21, 0
    %p125 = por %p123, %p124
    %p126 = scmp.ne.s32.totalorder %s118, %s120
    %p127 = scmp.eq.s32.totalorder %s26, 6
    %p128 = por %p126, %p127
    %p129 = scmp.ne.s32.totalorder %s120, %s121
    %p130 = scmp.eq.s32.totalorder %s26, 0
    %p131 = por %p129, %p130
    %p132 = scmp.ne.s32.totalorder %s120, %s121
    %p133 = scmp.eq.s32.totalorder %s27, 6
    %p134 = por %p132, %p133
    %p136 = scmp.ne.s32.totalorder %s121, %s135
    %p137 = scmp.eq.s32.totalorder %s27, 0
    %p138 = por %p136, %p137
    %s140 = sadd.s32 %s139, 1
    %p143 = scmp.eq.s32.totalorder %s21, 6
    %p144 = scmp.ne.s32.totalorder %s139, %s141
    %p145 = scmp.eq.s32.totalorder %s21, 0
    %p146 = por %p144, %p145
    %p147 = scmp.ne.s32.totalorder %s139, %s141
    %p148 = scmp.eq.s32.totalorder %s26, 6
    %p149 = por %p147, %p148
    %p150 = scmp.ne.s32.totalorder %s141, %s142
    %p151 = scmp.eq.s32.totalorder %s26, 0
    %p152 = por %p150, %p151
    %p153 = scmp.ne.s32.totalorder %s141, %s142
    %p154 = scmp.eq.s32.totalorder %s27, 6
    %p155 = por %p153, %p154
    %p157 = scmp.ne.s32.totalorder %s142, %s156
    %p158 = scmp.eq.s32.totalorder %s27, 0
    %p159 = por %p157, %p158
    %s161 = sadd.s32 %s160, 1
    %p164 = scmp.eq.s32.totalorder %s21, 6
    %p165 = scmp.ne.s32.totalorder %s160, %s162
    %p166 = scmp.eq.s32.totalorder %s21, 0
    %p167 = por %p165, %p166
    %p168 = scmp.ne.s32.totalorder %s160, %s162
    %p169 = scmp.eq.s32.totalorder %s26, 6
    %p170 = por %p168, %p169
    %p171 = scmp.ne.s32.totalorder %s162, %s163
    %p172 = scmp.eq.s32.totalorder %s26, 0
    %p173 = por %p171, %p172
    %p174 = scmp.ne.s32.totalorder %s162, %s163
    %p175 = scmp.eq.s32.totalorder %s27, 6
    %p176 = por %p174, %p175
    %p178 = scmp.ne.s32.totalorder %s163, %s177
    %p179 = scmp.eq.s32.totalorder %s27, 0
    %p180 = por %p178, %p179
    %s182 = sadd.s32 %s181, 1
    %p185 = scmp.eq.s32.totalorder %s21, 6
    %p186 = scmp.ne.s32.totalorder %s181, %s183
    %p187 = scmp.eq.s32.totalorder %s21, 0
    %p188 = por %p186, %p187
    %p189 = scmp.ne.s32.totalorder %s181, %s183
    %p190 = scmp.eq.s32.totalorder %s26, 6
    %p191 = por %p189, %p190
    %p192 = scmp.ne.s32.totalorder %s183, %s184
    %p193 = scmp.eq.s32.totalorder %s26, 0
    %p194 = por %p192, %p193
    %p195 = scmp.ne.s32.totalorder %s183, %s184
    %p196 = scmp.eq.s32.totalorder %s27, 6
    %p197 = por %p195, %p196
    %p199 = scmp.ne.s32.totalorder %s184, %s198
    %p200 = scmp.eq.s32.totalorder %s27, 0
    %p201 = por %p199, %p200
    %s202 = ssub.s32 %s21, %s28
    %p203 = scmp.eq.s32.totalorder %s202, 0
    %s205 = sadd.s32 %s204, 1
    %s206 = scalar_select %p203, %s204, %s205
    %p209 = pneg %p203
    %p210 = scmp.eq.s32.totalorder %s21, 6
    %p211 = por %p209, %p210
    %p212 = scmp.ne.s32.totalorder %s204, %s207
    %p213 = scmp.eq.s32.totalorder %s21, 0
    %p214 = por %p212, %p213
    %p215 = scmp.ne.s32.totalorder %s204, %s207
    %p216 = scmp.eq.s32.totalorder %s26, 6
    %p217 = por %p215, %p216
    %p218 = scmp.ne.s32.totalorder %s207, %s208
    %p219 = scmp.eq.s32.totalorder %s26, 0
    %p220 = por %p218, %p219
    %p221 = scmp.ne.s32.totalorder %s207, %s208
    %p222 = scmp.eq.s32.totalorder %s27, 6
    %p223 = por %p221, %p222
    %p225 = scmp.ne.s32.totalorder %s208, %s224
    %p226 = scmp.eq.s32.totalorder %s27, 0
    %p227 = por %p225, %p226
    %p228 = scmp.le.s32.totalorder 1, %s21
    %p229 = scmp.lt.s32.totalorder %s21, 8
    %p230 = pnand %p228, %p229
    %p231 = pneg %p230
    // Predicated region
    $region9: #{_seq2seq_device.3} parent=5 // pred_check
      _
    $region10: #{_seq2seq_device.3} parent=5 // pred_check_branch
      %233 = sbr.rel (%p230) target = $region12
    $region11: #{_seq2seq_device.3} parent=5 // pred_region
      %s234 = ssub.s32 %s21, 1
      // Predicated region
      $region13: #{_seq2seq_device.3} parent=11 // pred_check
        %p235 = pneg %p68
      $region14: #{_seq2seq_device.3} parent=11 // pred_check_branch
        %237 = sbr.rel (%p235) target = $region16
      $region15: #{_seq2seq_device.3} parent=11 // pred_region
        _
      $region16: #{_seq2seq_device.3} parent=11 // pred_fallthru
        _
      // Predicated region
      $region17: #{_seq2seq_device.3} parent=11 // pred_check
        %p238 = pneg %p89
      $region18: #{_seq2seq_device.3} parent=11 // pred_check_branch
        %240 = sbr.rel (%p238) target = $region20
      $region19: #{_seq2seq_device.3} parent=11 // pred_region
        _
      $region20: #{_seq2seq_device.3} parent=11 // pred_fallthru
        _
      // Predicated region
      $region21: #{_seq2seq_device.3} parent=11 // pred_check
        %p241 = pneg %p110
      $region22: #{_seq2seq_device.3} parent=11 // pred_check_branch
        %243 = sbr.rel (%p241) target = $region24
      $region23: #{_seq2seq_device.3} parent=11 // pred_region
        _
      $region24: #{_seq2seq_device.3} parent=11 // pred_fallthru
        _
      // Predicated region
      $region25: #{_seq2seq_device.3} parent=11 // pred_check
        %p244 = pneg %p131
      $region26: #{_seq2seq_device.3} parent=11 // pred_check_branch
        %246 = sbr.rel (%p244) target = $region28
      $region27: #{_seq2seq_device.3} parent=11 // pred_region
        _
      $region28: #{_seq2seq_device.3} parent=11 // pred_fallthru
        _
      // Predicated region
      $region29: #{_seq2seq_device.3} parent=11 // pred_check
        %p247 = pneg %p152
      $region30: #{_seq2seq_device.3} parent=11 // pred_check_branch
        %249 = sbr.rel (%p247) target = $region32
      $region31: #{_seq2seq_device.3} parent=11 // pred_region
        _
      $region32: #{_seq2seq_device.3} parent=11 // pred_fallthru
        _
      // Predicated region
      $region33: #{_seq2seq_device.3} parent=11 // pred_check
        %p250 = pneg %p173
      $region34: #{_seq2seq_device.3} parent=11 // pred_check_branch
        %252 = sbr.rel (%p250) target = $region36
      $region35: #{_seq2seq_device.3} parent=11 // pred_region
        _
      $region36: #{_seq2seq_device.3} parent=11 // pred_fallthru
        _
      // Predicated region
      $region37: #{_seq2seq_device.3} parent=11 // pred_check
        %p253 = pneg %p194
      $region38: #{_seq2seq_device.3} parent=11 // pred_check_branch
        %255 = sbr.rel (%p253) target = $region40
      $region39: #{_seq2seq_device.3} parent=11 // pred_region
        _
      $region40: #{_seq2seq_device.3} parent=11 // pred_fallthru
        _
    $region12: #{_seq2seq_device.3} parent=5 // pred_fallthru
      _
    %p256 = scmp.lt.s32.totalorder %s21, 7
    // Predicated region
    $region41: #{_seq2seq_device.3} parent=5 // pred_check
      %p257 = pneg %p256
    $region42: #{_seq2seq_device.3} parent=5 // pred_check_branch
      %259 = sbr.rel (%p257) target = $region44
    $region43: #{_seq2seq_device.3} parent=5 // pred_region
      // Predicated region
      $region45: #{_seq2seq_device.3} parent=43 // pred_check
        %p260 = pneg %p41
      $region46: #{_seq2seq_device.3} parent=43 // pred_check_branch
        %262 = sbr.rel (%p260) target = $region48
      $region47: #{_seq2seq_device.3} parent=43 // pred_region
        %p263 = scmp.lt.s32.totalorder %s21, 6
        %s264 = scalar_select %p263, %s21, 6
        %s265 = smul.addr %s264, 8
        %s266 = scalar_lea.vmem %s1, %s265
      $region48: #{_seq2seq_device.3} parent=43 // pred_fallthru
        _
    $region44: #{_seq2seq_device.3} parent=5 // pred_fallthru
      _
    %p267 = scmp.le.s32.totalorder 1, %s21
    %p268 = scmp.lt.s32.totalorder %s21, 8
    %p269 = pnand %p267, %p268
    %p270 = pneg %p269
    // Predicated region
    $region49: #{_seq2seq_device.3} parent=5 // pred_check
      _
    $region50: #{_seq2seq_device.3} parent=5 // pred_check_branch
      %272 = sbr.rel (%p269) target = $region52
    $region51: #{_seq2seq_device.3} parent=5 // pred_region
      %s273 = ssub.s32 %s21, 1
      %p274 = scmp.lt.s32.totalorder %s26, 6
      %s275 = scalar_select %p274, %s26, 6
      %s276 = smul.addr %s275, 8
      %s277 = scalar_lea.vmem %s1, %s276
      %p278 = pneg %p47
      %p279 = pneg %p44
      %p280 = pneg %p68
      %p281 = pneg %p65
      %p282 = pneg %p89
      %p283 = pneg %p86
      %p284 = pneg %p110
      %p285 = pneg %p107
      %p286 = pneg %p131
      %p287 = pneg %p128
      %p288 = pneg %p152
      %p289 = pneg %p149
      %p290 = pneg %p173
      %p291 = pneg %p170
      %p292 = pneg %p194
      %p293 = pneg %p191
      %p294 = pneg %p220
      %p295 = pneg %p217
      %p296 = scmp.lt.s32.totalorder %s26, 6
      %s297 = scalar_select %p296, %s26, 6
      %s298 = smul.addr %s297, 8
      %s299 = scalar_lea.vmem %s9, %s298
      %p300 = scmp.lt.s32.totalorder %s26, 6
      %s301 = scalar_select %p300, %s26, 6
      %s302 = smul.addr %s301, 8
      %s303 = scalar_lea.vmem %s1, %s302
      %p304 = scmp.lt.s32.totalorder %s26, 6
      %s305 = scalar_select %p304, %s26, 6
      %s306 = smul.addr %s305, 8
      %s307 = scalar_lea.vmem %s9, %s306
      %p308 = scmp.eq.s32.totalorder %s26, 0
      // Predicated region
      $region53: #{_seq2seq_device.3} parent=51 // pred_check
        %p309 = pneg %p308
      $region54: #{_seq2seq_device.3} parent=51 // pred_check_branch
        %311 = sbr.rel (%p309) target = $region56
      $region55: #{_seq2seq_device.3} parent=51 // pred_region
        %v312 = vld [vmem:[%s2] sm:$0xff]
        %313 = vst [vmem:[#allocation2] sm:$0xff] %v312
        %v314 = vld [vmem:[%s3] sm:$0xff]
        %315 = vst [vmem:[#allocation3] sm:$0xff] %v314
        %vm316 = vcmask 7168
        %317 = vst.msk [vmem:[#allocation4] sm:$0xff] %vm316, 0
      $region56: #{_seq2seq_device.3} parent=51 // pred_fallthru
        _
      %v318 = vld [vmem:[#allocation4] sm:$0xff]
      %v319 = vlaneseq
      %v320 = vand.u32 %v319, 127
      %321 = vset.pattern.permute.xlu0 0
      %322 = vperm.xlu0 %321, %v318
      %v323 = vpop.permute.xlu0 %322
      %vm324 = vcmp.eq.s32.totalorder %v323, %v320
      %v325 = vsel %vm324, 1, 0
      %v326 = vcvt.s32.f32 %v325
      %v327 = vld [vmem:[%s4] sm:$0xff]
      %v328 = vld [vmem:[%s4 + $0x8] sm:$0xff]
      %v329 = vld [vmem:[%s4 + $0x10] sm:$0xff]
      %v330 = vld [vmem:[%s4 + $0x18] sm:$0xff]
      %v331 = vld [vmem:[%s4 + $0x20] sm:$0xff]
      %v332 = vld [vmem:[%s4 + $0x28] sm:$0xff]
      %vm333 = vcmask 392192
      %v335 = vsel %vm333, %v326, 0
      %337 = vmatprep.subr.mxu0 0.0
      %338 = vmatpush1.msra.mxu0 %v327
      %339 = vmatprep.subr.mxu0 0.0
      %340 = vmatpush1.msra.mxu0 %v328
      %341 = vmatprep.subr.mxu0 0.0
      %342 = vmatpush1.msra.mxu0 %v329
      %343 = vmatprep.subr.mxu0 0.0
      %344 = vmatpush1.msra.mxu0 %v330
      %345 = vmatprep.subr.mxu0 0.0
      %346 = vmatpush1.msra.mxu0 %v331
      %347 = vmatprep.subr.mxu0 0.0
      %348 = vmatpush1.msra.mxu0 %v332
      %349 = vmatprep.subr.mxu0 0.0
      %350 = vmatpush1.msra.mxu0 0.0
      %351 = vmatprep.subr.mxu0 0.0
      %352 = vmatpush1.msra.mxu0 0.0
      %353 = vmatprep.subr.mxu0 0.0
      %354 = vmatpush1.msra.mxu0 0.0
      %355 = vmatprep.subr.mxu0 0.0
      %356 = vmatpush1.msra.mxu0 0.0
      %357 = vmatprep.subr.mxu0 0.0
      %358 = vmatpush1.msra.mxu0 0.0
      %359 = vmatprep.subr.mxu0 0.0
      %360 = vmatpush1.msra.mxu0 0.0
      %361 = vmatprep.subr.mxu0 0.0
      %362 = vmatpush1.msra.mxu0 0.0
      %363 = vmatprep.subr.mxu0 0.0
      %364 = vmatpush1.msra.mxu0 0.0
      %365 = vmatprep.subr.mxu0 0.0
      %366 = vmatpush1.msra.mxu0 0.0
      %367 = vmatprep.subr.mxu0 0.0
      %368 = vmatpush1.msra.mxu0 0.0
      %369 = vmatprep.subr.mxu0 0.0
      %370 = vmatpush1.msra.mxu0 0.0
      %371 = vmatprep.subr.mxu0 0.0
      %372 = vmatpush1.msra.mxu0 0.0
      %373 = vmatprep.subr.mxu0 0.0
      %374 = vmatpush1.msra.mxu0 0.0
      %375 = vmatprep.subr.mxu0 0.0
      %376 = vmatpush1.msra.mxu0 0.0
      %377 = vmatprep.subr.mxu0 0.0
      %378 = vmatpush1.msra.mxu0 0.0
      %379 = vmatprep.subr.mxu0 0.0
      %380 = vmatpush1.msra.mxu0 0.0
      %381 = vmatprep.subr.mxu0 0.0
      %382 = vmatpush1.msra.mxu0 0.0
      %383 = vmatprep.subr.mxu0 0.0
      %384 = vmatpush1.msra.mxu0 0.0
      %385 = vmatprep.subr.mxu0 0.0
      %386 = vmatpush1.msra.mxu0 0.0
      %387 = vmatprep.subr.mxu0 0.0
      %388 = vmatpush1.msra.mxu0 0.0
      %389 = vmatprep.subr.mxu0 0.0
      %390 = vmatpush1.msra.mxu0 0.0
      %391 = vmatprep.subr.mxu0 0.0
      %392 = vmatpush1.msra.mxu0 0.0
      %393 = vmatprep.subr.mxu0 0.0
      %394 = vmatpush1.msra.mxu0 0.0
      %395 = vmatprep.subr.mxu0 0.0
      %396 = vmatpush1.msra.mxu0 0.0
      %397 = vmatprep.subr.mxu0 0.0
      %398 = vmatpush1.msra.mxu0 0.0
      %399 = vmatprep.subr.mxu0 0.0
      %400 = vmatpush1.msra.mxu0 0.0
      %401 = vmatprep.mubr.f32.mxu0 0.0
      %402 = vmatmul.mubr.f32.gmra.mrb[0].mxu0 %v335
      %v403 = vpop.f32.mrb[0].mxu0
      %v404 = vadd.f32 0.0, %v403
      %v405 = vpop.f32.mrb[0].mxu0
      %406 = vdwg.mxu0
      %s407 = sld [smem:[#allocation6 + %s26]]
      %p408 = scmp.gt.s32.totalorder %s407, 0
      %v409 = vld [vmem:[%s303] sm:$0xff]
      %s410 = scalar_select %p408, 1, 0
      %v411 = vstv %s410
      %vm412 = vcmp.eq.s32.totalorder %v411, 1
      %v413 = vsel %vm412, %v409, %v404
      %v414 = vld [vmem:[#allocation2] sm:$0xff]
      %v415 = vld [vmem:[%s5] sm:$0xff]
      %v416 = vld [vmem:[%s5 + $0x8] sm:$0xff]
      %v417 = vld [vmem:[%s5 + $0x10] sm:$0xff]
      %v418 = vld [vmem:[%s5 + $0x18] sm:$0xff]
      %v419 = vld [vmem:[%s5 + $0x20] sm:$0xff]
      %v420 = vld [vmem:[%s5 + $0x28] sm:$0xff]
      %v421 = vld [vmem:[%s5 + $0x30] sm:$0xff]
      %v422 = vld [vmem:[%s5 + $0x38] sm:$0xff]
      %v423 = vld [vmem:[%s5 + $0x40] sm:$0xff]
      %v424 = vld [vmem:[%s5 + $0x48] sm:$0xff]
      %v425 = vld [vmem:[%s5 + $0x50] sm:$0xff]
      %v426 = vld [vmem:[%s5 + $0x58] sm:$0xff]
      %v427 = vld [vmem:[%s5 + $0x60] sm:$0xff]
      %v428 = vld [vmem:[%s5 + $0x68] sm:$0xff]
      %v429 = vld [vmem:[%s5 + $0x70] sm:$0xff]
      %v430 = vld [vmem:[%s5 + $0x78] sm:$0xff]
      %v431 = vld [vmem:[%s5 + $0x80] sm:$0xff]
      %v432 = vld [vmem:[%s5 + $0x88] sm:$0xff]
      %v433 = vld [vmem:[%s5 + $0x90] sm:$0xff]
      %v434 = vld [vmem:[%s5 + $0x98] sm:$0xff]
      %v435 = vld [vmem:[%s5 + $0xa0] sm:$0xff]
      %v436 = vld [vmem:[%s5 + $0xa8] sm:$0xff]
      %v437 = vld [vmem:[%s5 + $0xb0] sm:$0xff]
      %v438 = vld [vmem:[%s5 + $0xb8] sm:$0xff]
      %v439 = vld [vmem:[%s5 + $0xc0] sm:$0xff]
      %v440 = vld [vmem:[%s5 + $0xc8] sm:$0xff]
      %v441 = vld [vmem:[%s5 + $0xd0] sm:$0xff]
      %v442 = vld [vmem:[%s5 + $0xd8] sm:$0xff]
      %v443 = vld [vmem:[%s5 + $0xe0] sm:$0xff]
      %v444 = vld [vmem:[%s5 + $0xe8] sm:$0xff]
      %v445 = vld [vmem:[%s5 + $0xf0] sm:$0xff]
      %v446 = vld [vmem:[%s5 + $0xf8] sm:$0xff]
      %v447 = vld [vmem:[%s5 + $0x100] sm:$0xff]
      %v448 = vld [vmem:[%s5 + $0x108] sm:$0xff]
      %v449 = vld [vmem:[%s5 + $0x110] sm:$0xff]
      %v450 = vld [vmem:[%s5 + $0x118] sm:$0xff]
      %v451 = vld [vmem:[%s5 + $0x120] sm:$0xff]
      %v452 = vld [vmem:[%s5 + $0x128] sm:$0xff]
      %v453 = vld [vmem:[%s5 + $0x130] sm:$0xff]
      %v454 = vld [vmem:[%s5 + $0x138] sm:$0xff]
      %v455 = vld [vmem:[%s5 + $0x140] sm:$0xff]
      %v456 = vld [vmem:[%s5 + $0x148] sm:$0xff]
      %v457 = vld [vmem:[%s5 + $0x150] sm:$0xff]
      %v458 = vld [vmem:[%s5 + $0x158] sm:$0xff]
      %v459 = vld [vmem:[%s5 + $0x160] sm:$0xff]
      %v460 = vld [vmem:[%s5 + $0x168] sm:$0xff]
      %v461 = vld [vmem:[%s5 + $0x170] sm:$0xff]
      %v462 = vld [vmem:[%s5 + $0x178] sm:$0xff]
      %v463 = vld [vmem:[%s5 + $0x180] sm:$0xff]
      %v464 = vld [vmem:[%s5 + $0x188] sm:$0xff]
      %v465 = vld [vmem:[%s5 + $0x190] sm:$0xff]
      %v466 = vld [vmem:[%s5 + $0x198] sm:$0xff]
      %v467 = vld [vmem:[%s5 + $0x1a0] sm:$0xff]
      %v468 = vld [vmem:[%s5 + $0x1a8] sm:$0xff]
      %v469 = vld [vmem:[%s5 + $0x1b0] sm:$0xff]
      %v470 = vld [vmem:[%s5 + $0x1b8] sm:$0xff]
      %v471 = vld [vmem:[%s5 + $0x1c0] sm:$0xff]
      %v472 = vld [vmem:[%s5 + $0x1c8] sm:$0xff]
      %v473 = vld [vmem:[%s5 + $0x1d0] sm:$0xff]
      %v474 = vld [vmem:[%s5 + $0x1d8] sm:$0xff]
      %v475 = vld [vmem:[%s5 + $0x1e0] sm:$0xff]
      %v476 = vld [vmem:[%s5 + $0x1e8] sm:$0xff]
      %v477 = vld [vmem:[%s5 + $0x1f0] sm:$0xff]
      %v478 = vld [vmem:[%s5 + $0x1f8] sm:$0xff]
      %v479 = vld [vmem:[%s5 + $0x200] sm:$0xff]
      %v480 = vld [vmem:[%s5 + $0x208] sm:$0xff]
      %v481 = vld [vmem:[%s5 + $0x210] sm:$0xff]
      %v482 = vld [vmem:[%s5 + $0x218] sm:$0xff]
      %v483 = vld [vmem:[%s5 + $0x220] sm:$0xff]
      %v484 = vld [vmem:[%s5 + $0x228] sm:$0xff]
      %v485 = vld [vmem:[%s5 + $0x230] sm:$0xff]
      %v486 = vld [vmem:[%s5 + $0x238] sm:$0xff]
      %v487 = vld [vmem:[%s5 + $0x240] sm:$0xff]
      %v488 = vld [vmem:[%s5 + $0x248] sm:$0xff]
      %v489 = vld [vmem:[%s5 + $0x250] sm:$0xff]
      %v490 = vld [vmem:[%s5 + $0x258] sm:$0xff]
      %v491 = vld [vmem:[%s5 + $0x260] sm:$0xff]
      %v492 = vld [vmem:[%s5 + $0x268] sm:$0xff]
      %v493 = vld [vmem:[%s5 + $0x270] sm:$0xff]
      %v494 = vld [vmem:[%s5 + $0x278] sm:$0xff]
      %v495 = vld [vmem:[%s5 + $0x280] sm:$0xff]
      %v496 = vld [vmem:[%s5 + $0x288] sm:$0xff]
      %v497 = vld [vmem:[%s5 + $0x290] sm:$0xff]
      %v498 = vld [vmem:[%s5 + $0x298] sm:$0xff]
      %v499 = vld [vmem:[%s5 + $0x2a0] sm:$0xff]
      %v500 = vld [vmem:[%s5 + $0x2a8] sm:$0xff]
      %v501 = vld [vmem:[%s5 + $0x2b0] sm:$0xff]
      %v502 = vld [vmem:[%s5 + $0x2b8] sm:$0xff]
      %v503 = vld [vmem:[%s5 + $0x2c0] sm:$0xff]
      %v504 = vld [vmem:[%s5 + $0x2c8] sm:$0xff]
      %v505 = vld [vmem:[%s5 + $0x2d0] sm:$0xff]
      %v506 = vld [vmem:[%s5 + $0x2d8] sm:$0xff]
      %v507 = vld [vmem:[%s5 + $0x2e0] sm:$0xff]
      %v508 = vld [vmem:[%s5 + $0x2e8] sm:$0xff]
      %v509 = vld [vmem:[%s5 + $0x2f0] sm:$0xff]
      %v510 = vld [vmem:[%s5 + $0x2f8] sm:$0xff]
      %v511 = vld [vmem:[%s5 + $0x300] sm:$0xff]
      %v512 = vld [vmem:[%s5 + $0x308] sm:$0xff]
      %v513 = vld [vmem:[%s5 + $0x310] sm:$0xff]
      %v514 = vld [vmem:[%s5 + $0x318] sm:$0xff]
      %v515 = vld [vmem:[%s5 + $0x320] sm:$0xff]
      %v516 = vld [vmem:[%s5 + $0x328] sm:$0xff]
      %v517 = vld [vmem:[%s5 + $0x330] sm:$0xff]
      %v518 = vld [vmem:[%s5 + $0x338] sm:$0xff]
      %v519 = vld [vmem:[%s5 + $0x340] sm:$0xff]
      %v520 = vld [vmem:[%s5 + $0x348] sm:$0xff]
      %v521 = vld [vmem:[%s5 + $0x350] sm:$0xff]
      %v522 = vld [vmem:[%s5 + $0x358] sm:$0xff]
      %v523 = vld [vmem:[%s5 + $0x360] sm:$0xff]
      %v524 = vld [vmem:[%s5 + $0x368] sm:$0xff]
      %v525 = vld [vmem:[%s5 + $0x370] sm:$0xff]
      %v526 = vld [vmem:[%s5 + $0x378] sm:$0xff]
      %v527 = vld [vmem:[%s5 + $0x380] sm:$0xff]
      %v528 = vld [vmem:[%s5 + $0x388] sm:$0xff]
      %v529 = vld [vmem:[%s5 + $0x390] sm:$0xff]
      %v530 = vld [vmem:[%s5 + $0x398] sm:$0xff]
      %v531 = vld [vmem:[%s5 + $0x3a0] sm:$0xff]
      %v532 = vld [vmem:[%s5 + $0x3a8] sm:$0xff]
      %v533 = vld [vmem:[%s5 + $0x3b0] sm:$0xff]
      %v534 = vld [vmem:[%s5 + $0x3b8] sm:$0xff]
      %v535 = vld [vmem:[%s5 + $0x3c0] sm:$0xff]
      %v536 = vld [vmem:[%s5 + $0x3c8] sm:$0xff]
      %v537 = vld [vmem:[%s5 + $0x3d0] sm:$0xff]
      %v538 = vld [vmem:[%s5 + $0x3d8] sm:$0xff]
      %v539 = vld [vmem:[%s5 + $0x3e0] sm:$0xff]
      %v540 = vld [vmem:[%s5 + $0x3e8] sm:$0xff]
      %v541 = vld [vmem:[%s5 + $0x3f0] sm:$0xff]
      %v542 = vld [vmem:[%s5 + $0x3f8] sm:$0xff]
      %v543 = vld [vmem:[%s6] sm:$0xf]
      %v545 = vlaneseq
      %v546 = vshrl.u32 %v545, 7
      %v547 = vsub.s32 0, %v546
      %v548 = vrot.slane %v543, %v547
      %v549 = vlaneseq
      %v550 = vshrl.u32 %v549, 7
      %v551 = vsub.s32 1, %v550
      %v552 = vrot.slane %v543, %v551
      %v553 = vlaneseq
      %v554 = vshrl.u32 %v553, 7
      %v555 = vsub.s32 2, %v554
      %v556 = vrot.slane %v543, %v555
      %v557 = vlaneseq
      %v558 = vshrl.u32 %v557, 7
      %v559 = vsub.s32 3, %v558
      %v560 = vrot.slane %v543, %v559
      %565 = vmatprep.subr.mxu0 %v416
      %566 = vmatpush1.msra.mxu0 %v415
      %567 = vmatprep.subr.mxu0 %v420
      %568 = vmatpush1.msra.mxu0 %v419
      %569 = vmatprep.subr.mxu0 %v424
      %570 = vmatpush1.msra.mxu0 %v423
      %571 = vmatprep.subr.mxu0 %v428
      %572 = vmatpush1.msra.mxu0 %v427
      %573 = vmatprep.subr.mxu0 %v432
      %574 = vmatpush1.msra.mxu0 %v431
      %575 = vmatprep.subr.mxu0 %v436
      %576 = vmatpush1.msra.mxu0 %v435
      %577 = vmatprep.subr.mxu0 %v440
      %578 = vmatpush1.msra.mxu0 %v439
      %579 = vmatprep.subr.mxu0 %v444
      %580 = vmatpush1.msra.mxu0 %v443
      %581 = vmatprep.subr.mxu0 %v448
      %582 = vmatpush1.msra.mxu0 %v447
      %583 = vmatprep.subr.mxu0 %v452
      %584 = vmatpush1.msra.mxu0 %v451
      %585 = vmatprep.subr.mxu0 %v456
      %586 = vmatpush1.msra.mxu0 %v455
      %587 = vmatprep.subr.mxu0 %v460
      %588 = vmatpush1.msra.mxu0 %v459
      %589 = vmatprep.subr.mxu0 %v464
      %590 = vmatpush1.msra.mxu0 %v463
      %591 = vmatprep.subr.mxu0 %v468
      %592 = vmatpush1.msra.mxu0 %v467
      %593 = vmatprep.subr.mxu0 %v472
      %594 = vmatpush1.msra.mxu0 %v471
      %595 = vmatprep.subr.mxu0 %v476
      %596 = vmatpush1.msra.mxu0 %v475
      %597 = vmatprep.subr.mxu0 %v480
      %598 = vmatpush1.msra.mxu0 %v479
      %599 = vmatprep.subr.mxu0 %v484
      %600 = vmatpush1.msra.mxu0 %v483
      %601 = vmatprep.subr.mxu0 %v488
      %602 = vmatpush1.msra.mxu0 %v487
      %603 = vmatprep.subr.mxu0 %v492
      %604 = vmatpush1.msra.mxu0 %v491
      %605 = vmatprep.subr.mxu0 %v496
      %606 = vmatpush1.msra.mxu0 %v495
      %607 = vmatprep.subr.mxu0 %v500
      %608 = vmatpush1.msra.mxu0 %v499
      %609 = vmatprep.subr.mxu0 %v504
      %610 = vmatpush1.msra.mxu0 %v503
      %611 = vmatprep.subr.mxu0 %v508
      %612 = vmatpush1.msra.mxu0 %v507
      %613 = vmatprep.subr.mxu0 %v512
      %614 = vmatpush1.msra.mxu0 %v511
      %615 = vmatprep.subr.mxu0 %v516
      %616 = vmatpush1.msra.mxu0 %v515
      %617 = vmatprep.subr.mxu0 %v520
      %618 = vmatpush1.msra.mxu0 %v519
      %619 = vmatprep.subr.mxu0 %v524
      %620 = vmatpush1.msra.mxu0 %v523
      %621 = vmatprep.subr.mxu0 %v528
      %622 = vmatpush1.msra.mxu0 %v527
      %623 = vmatprep.subr.mxu0 %v532
      %624 = vmatpush1.msra.mxu0 %v531
      %625 = vmatprep.subr.mxu0 %v536
      %626 = vmatpush1.msra.mxu0 %v535
      %627 = vmatprep.subr.mxu0 %v540
      %628 = vmatpush1.msra.mxu0 %v539
      %629 = vmatprep.mubr.f32.mxu0 %v414
      %630 = vmatmul.mubr.f32.gmra.mrb[0].mxu0 %v413
      %v631 = vpop.f32.mrb[0].mxu0
      %v632 = vadd.f32 %v548, %v631
      %v633 = vpop.f32.mrb[0].mxu0
      %v634 = vadd.f32 %v552, %v633
      %635 = vdwg.mxu0
      %636 = vmatprep.subr.mxu0 %v418
      %637 = vmatpush1.msra.mxu0 %v417
      %638 = vmatprep.subr.mxu0 %v422
      %639 = vmatpush1.msra.mxu0 %v421
      %640 = vmatprep.subr.mxu0 %v426
      %641 = vmatpush1.msra.mxu0 %v425
      %642 = vmatprep.subr.mxu0 %v430
      %643 = vmatpush1.msra.mxu0 %v429
      %644 = vmatprep.subr.mxu0 %v434
      %645 = vmatpush1.msra.mxu0 %v433
      %646 = vmatprep.subr.mxu0 %v438
      %647 = vmatpush1.msra.mxu0 %v437
      %648 = vmatprep.subr.mxu0 %v442
      %649 = vmatpush1.msra.mxu0 %v441
      %650 = vmatprep.subr.mxu0 %v446
      %651 = vmatpush1.msra.mxu0 %v445
      %652 = vmatprep.subr.mxu0 %v450
      %653 = vmatpush1.msra.mxu0 %v449
      %654 = vmatprep.subr.mxu0 %v454
      %655 = vmatpush1.msra.mxu0 %v453
      %656 = vmatprep.subr.mxu0 %v458
      %657 = vmatpush1.msra.mxu0 %v457
      %658 = vmatprep.subr.mxu0 %v462
      %659 = vmatpush1.msra.mxu0 %v461
      %660 = vmatprep.subr.mxu0 %v466
      %661 = vmatpush1.msra.mxu0 %v465
      %662 = vmatprep.subr.mxu0 %v470
      %663 = vmatpush1.msra.mxu0 %v469
      %664 = vmatprep.subr.mxu0 %v474
      %665 = vmatpush1.msra.mxu0 %v473
      %666 = vmatprep.subr.mxu0 %v478
      %667 = vmatpush1.msra.mxu0 %v477
      %668 = vmatprep.subr.mxu0 %v482
      %669 = vmatpush1.msra.mxu0 %v481
      %670 = vmatprep.subr.mxu0 %v486
      %671 = vmatpush1.msra.mxu0 %v485
      %672 = vmatprep.subr.mxu0 %v490
      %673 = vmatpush1.msra.mxu0 %v489
      %674 = vmatprep.subr.mxu0 %v494
      %675 = vmatpush1.msra.mxu0 %v493
      %676 = vmatprep.subr.mxu0 %v498
      %677 = vmatpush1.msra.mxu0 %v497
      %678 = vmatprep.subr.mxu0 %v502
      %679 = vmatpush1.msra.mxu0 %v501
      %680 = vmatprep.subr.mxu0 %v506
      %681 = vmatpush1.msra.mxu0 %v505
      %682 = vmatprep.subr.mxu0 %v510
      %683 = vmatpush1.msra.mxu0 %v509
      %684 = vmatprep.subr.mxu0 %v514
      %685 = vmatpush1.msra.mxu0 %v513
      %686 = vmatprep.subr.mxu0 %v518
      %687 = vmatpush1.msra.mxu0 %v517
      %688 = vmatprep.subr.mxu0 %v522
      %689 = vmatpush1.msra.mxu0 %v521
      %690 = vmatprep.subr.mxu0 %v526
      %691 = vmatpush1.msra.mxu0 %v525
      %692 = vmatprep.subr.mxu0 %v530
      %693 = vmatpush1.msra.mxu0 %v529
      %694 = vmatprep.subr.mxu0 %v534
      %695 = vmatpush1.msra.mxu0 %v533
      %696 = vmatprep.subr.mxu0 %v538
      %697 = vmatpush1.msra.mxu0 %v537
      %698 = vmatprep.subr.mxu0 %v542
      %699 = vmatpush1.msra.mxu0 %v541
      %700 = vmatprep.mubr.f32.mxu0 %v414
      %701 = vmatmul.mubr.f32.gmra.mrb[0].mxu0 %v413
      %v702 = vpop.f32.mrb[0].mxu0
      %v703 = vadd.f32 %v556, %v702
      %v704 = vpop.f32.mrb[0].mxu0
      %v705 = vadd.f32 %v560, %v704
      %706 = vdwg.mxu0
      %v707 = vxor.u32 %v632, 2147483648
      %v708 = vmul.f32 %v707, 1.442695
      %v709 = vpow.pop %v708
      %v710 = vadd.f32 %v709, 1.0
      %v711 = vrcp.pop %v710
      %v712 = vmul.f32 1.0, %v711
      %v713 = vxor.u32 %v634, 2147483648
      %v714 = vmul.f32 %v713, 1.442695
      %v715 = vpow.pop %v714
      %v716 = vadd.f32 %v715, 1.0
      %v717 = vrcp.pop %v716
      %v718 = vmul.f32 1.0, %v717
      %v719 = vtanh.pop %v703
      %v720 = vxor.u32 %v705, 2147483648
      %v721 = vmul.f32 %v720, 1.442695
      %v722 = vpow.pop %v721
      %v723 = vadd.f32 %v722, 1.0
      %v724 = vrcp.pop %v723
      %v725 = vmul.f32 1.0, %v724
      %v726 = vld [vmem:[#allocation3] sm:$0xff]
      %v727 = vmul.f32 %v718, %v726
      %v728 = vmul.f32 %v712, %v719
      %v729 = vadd.f32 %v727, %v728
      %v730 = vtanh.pop %v729
      %v731 = vmul.f32 %v725, %v730
      %732 = vst [vmem:[#allocation2] sm:$0xff] %v731
      %733 = vst [vmem:[#allocation3] sm:$0xff] %v729
      %v734 = vld [vmem:[%s7] sm:$0xff]
      %v735 = vld [vmem:[%s7 + $0x8] sm:$0xff]
      %v736 = vld [vmem:[%s7 + $0x10] sm:$0xff]
      %v737 = vld [vmem:[%s7 + $0x18] sm:$0xff]
      %v738 = vld [vmem:[%s7 + $0x20] sm:$0xff]
      %v739 = vld [vmem:[%s7 + $0x28] sm:$0xff]
      %v740 = vld [vmem:[%s7 + $0x30] sm:$0xff]
      %v741 = vld [vmem:[%s7 + $0x38] sm:$0xff]
      %v742 = vld [vmem:[%s7 + $0x40] sm:$0xff]
      %v743 = vld [vmem:[%s7 + $0x48] sm:$0xff]
      %v744 = vld [vmem:[%s7 + $0x50] sm:$0xff]
      %v745 = vld [vmem:[%s7 + $0x58] sm:$0xff]
      %v746 = vld [vmem:[%s7 + $0x60] sm:$0xff]
      %v747 = vld [vmem:[%s7 + $0x68] sm:$0xff]
      %v748 = vld [vmem:[%s7 + $0x70] sm:$0xff]
      %v749 = vld [vmem:[%s7 + $0x78] sm:$0xff]
      %v750 = vld [vmem:[%s8] sm:$0x1]
      %v752 = vlaneseq
      %v753 = vshrl.u32 %v752, 7
      %v754 = vsub.s32 0, %v753
      %v755 = vrot.slane %v750, %v754
      %757 = vmatprep.subr.mxu0 0.0
      %758 = vmatpush1.msra.mxu0 %v734
      %759 = vmatprep.subr.mxu0 0.0
      %760 = vmatpush1.msra.mxu0 %v735
      %761 = vmatprep.subr.mxu0 0.0
      %762 = vmatpush1.msra.mxu0 %v736
      %763 = vmatprep.subr.mxu0 0.0
      %764 = vmatpush1.msra.mxu0 %v737
      %765 = vmatprep.subr.mxu0 0.0
      %766 = vmatpush1.msra.mxu0 %v738
      %767 = vmatprep.subr.mxu0 0.0
      %768 = vmatpush1.msra.mxu0 %v739
      %769 = vmatprep.subr.mxu0 0.0
      %770 = vmatpush1.msra.mxu0 %v740
      %771 = vmatprep.subr.mxu0 0.0
      %772 = vmatpush1.msra.mxu0 %v741
      %773 = vmatprep.subr.mxu0 0.0
      %774 = vmatpush1.msra.mxu0 %v742
      %775 = vmatprep.subr.mxu0 0.0
      %776 = vmatpush1.msra.mxu0 %v743
      %777 = vmatprep.subr.mxu0 0.0
      %778 = vmatpush1.msra.mxu0 %v744
      %779 = vmatprep.subr.mxu0 0.0
      %780 = vmatpush1.msra.mxu0 %v745
      %781 = vmatprep.subr.mxu0 0.0
      %782 = vmatpush1.msra.mxu0 %v746
      %783 = vmatprep.subr.mxu0 0.0
      %784 = vmatpush1.msra.mxu0 %v747
      %785 = vmatprep.subr.mxu0 0.0
      %786 = vmatpush1.msra.mxu0 %v748
      %787 = vmatprep.subr.mxu0 0.0
      %788 = vmatpush1.msra.mxu0 %v749
      %789 = vmatprep.subr.mxu0 0.0
      %790 = vmatpush1.msra.mxu0 0.0
      %791 = vmatprep.subr.mxu0 0.0
      %792 = vmatpush1.msra.mxu0 0.0
      %793 = vmatprep.subr.mxu0 0.0
      %794 = vmatpush1.msra.mxu0 0.0
      %795 = vmatprep.subr.mxu0 0.0
      %796 = vmatpush1.msra.mxu0 0.0
      %797 = vmatprep.subr.mxu0 0.0
      %798 = vmatpush1.msra.mxu0 0.0
      %799 = vmatprep.subr.mxu0 0.0
      %800 = vmatpush1.msra.mxu0 0.0
      %801 = vmatprep.subr.mxu0 0.0
      %802 = vmatpush1.msra.mxu0 0.0
      %803 = vmatprep.subr.mxu0 0.0
      %804 = vmatpush1.msra.mxu0 0.0
      %805 = vmatprep.subr.mxu0 0.0
      %806 = vmatpush1.msra.mxu0 0.0
      %807 = vmatprep.subr.mxu0 0.0
      %808 = vmatpush1.msra.mxu0 0.0
      %809 = vmatprep.subr.mxu0 0.0
      %810 = vmatpush1.msra.mxu0 0.0
      %811 = vmatprep.subr.mxu0 0.0
      %812 = vmatpush1.msra.mxu0 0.0
      %813 = vmatprep.subr.mxu0 0.0
      %814 = vmatpush1.msra.mxu0 0.0
      %815 = vmatprep.subr.mxu0 0.0
      %816 = vmatpush1.msra.mxu0 0.0
      %817 = vmatprep.subr.mxu0 0.0
      %818 = vmatpush1.msra.mxu0 0.0
      %819 = vmatprep.subr.mxu0 0.0
      %820 = vmatpush1.msra.mxu0 0.0
      %821 = vmatprep.mubr.f32.mxu0 0.0
      %822 = vmatmul.mubr.f32.gmra.mrb[0].mxu0 %v731
      %v823 = vpop.f32.mrb[0].mxu0
      %v824 = vadd.f32 %v755, %v823
      %v825 = vpop.f32.mrb[0].mxu0
      %826 = vdwg.mxu0
      %827 = vst [vmem:[%s307] sm:$0xff] %v824
      %828 = vmax.xlane.f32.xlu0 %v824
      %v829 = vpop.xlane.xlu0 %828
      %vm830 = vcmp.eq.f32.partialorder %v824, %v829
      %v831 = vsel %vm830, %v320, 128
      %v832 = vand.u32 %v831, 65535
      %v833 = vshra.s32 %v831, 16
      %v834 = vcvt.s32.f32 %v832
      %v835 = vcvt.s32.f32 %v833
      %836 = vmin.xlane.f32.xlu0 %v835
      %v837 = vpop.xlane.xlu0 %836
      %vm838 = vcmp.eq.f32.partialorder %v835, %v837
      %v839 = vsel %vm838, %v834, inf
      %840 = vmin.xlane.f32.xlu0 %v839
      %v841 = vpop.xlane.xlu0 %840
      %v842 = vcvt.f32.s32 %v841
      %v843 = vcvt.f32.s32 %v837
      %v844 = vshll.u32 %v843, 16
      %v845 = vadd.s32 %v844, %v842
      %vm846 = vcmask 7168
      %847 = vst.msk [vmem:[#allocation4] sm:$0xff] %vm846, %v845
      %p848 = scmp.lt.s32.totalorder %s26, 6
      %s849 = scalar_select %p848, %s26, 6
      %s850 = smul.addr %s849, 8
      %s851 = scalar_lea.vmem %s9, %s850
      // Predicated region
      $region57: #{_seq2seq_device.3} parent=51 // pred_check
        %p852 = pneg %p217
      $region58: #{_seq2seq_device.3} parent=51 // pred_check_branch
        %854 = sbr.rel (%p852) target = $region60
      $region59: #{_seq2seq_device.3} parent=51 // pred_region
        _
      $region60: #{_seq2seq_device.3} parent=51 // pred_fallthru
        _
    $region52: #{_seq2seq_device.3} parent=5 // pred_fallthru
      _
    %p855 = scmp.le.s32.totalorder 2, %s21
    // Predicated region
    $region61: #{_seq2seq_device.3} parent=5 // pred_check
      %p856 = pneg %p855
    $region62: #{_seq2seq_device.3} parent=5 // pred_check_branch
      %858 = sbr.rel (%p856) target = $region64
    $region63: #{_seq2seq_device.3} parent=5 // pred_region
      %s859 = ssub.s32 %s21, 2
      // Predicated region
      $region65: #{_seq2seq_device.3} parent=63 // pred_check
        %p860 = pneg %p223
      $region66: #{_seq2seq_device.3} parent=63 // pred_check_branch
        %862 = sbr.rel (%p860) target = $region68
      $region67: #{_seq2seq_device.3} parent=63 // pred_region
        %p863 = scmp.lt.s32.totalorder %s27, 6
        %s864 = scalar_select %p863, %s27, 6
        %s865 = smul.addr %s864, 8
        %s866 = scalar_lea.vmem %s9, %s865
      $region68: #{_seq2seq_device.3} parent=63 // pred_fallthru
        _
    $region64: #{_seq2seq_device.3} parent=5 // pred_fallthru
      _
  $region6: #{_seq2seq_device.3} parent=0 // loop_footer
    %s25 = sadd.s32 1, %s21
  $region7: #{_seq2seq_device.3} parent=0 // loop_footer_branch
    %20 = sbr.rel target = $region3
  $region8: #{_seq2seq_device.3} parent=0 // loop_exit
    _

</llo_original>
